<compile_context>
chip_gen: v7x
topology: tpu7x:2x2x1
jax: 0.10.0
libtpu: 0.0.40
codegen_flags: <defaults>
</compile_context>

<pallas_src>
import math

import jax
import jax.numpy as jnp
from jax.experimental import pallas as pl
from jax.experimental.pallas import tpu as pltpu  # noqa: F401  (kept for parity; not needed at this size)

# ---------------- model hyperparams (small, consistent with the module) -----
VOCAB = 50
VOCAB_PAD = 64          # pad vocab so the one-hot matmul K-dim is a nice multiple of 8
EMBED = 32              # embed_size
HEADS = 4
HEAD_DIM = EMBED // HEADS  # 8
FF = 4 * EMBED          # forward_expansion * embed_size = 128
MAX_LEN = 8             # max_length == sequence length (fc1 requires this)
FEAT = 16               # feat_size
N = 2                   # batch
NT = N * MAX_LEN        # 16 token rows, batch-major (row = b*S + s)
HEAD_COLS = MAX_LEN * FEAT  # 128
LN_EPS = 1e-5
BN_EPS = 1e-5
# PyTorch: softmax(masked_fill(energy, -1e20) / sqrt(embed_size)); scale is folded
# into the Q weight, so masked entries must be -1e20/sqrt(E) for exact parity.
MASKVAL = -1e20 / math.sqrt(EMBED)


# ---------------- single fused kernel ----------------------------------------
def fused_kernel(src_row_ref,        # (1, 16)  int32 tokens (lane-oriented, for key mask)
                 src_col_ref,        # (16, 1)  int32 tokens (sublane-oriented, for gather)
                 word_ref,           # (64, 32) padded word embedding table
                 pos_ref,            # (8, 32)  positional embedding
                 wqv_ref,            # (32, 64) [Wq_blockdiag*scale | Wv_blockdiag]
                 wko_ref,            # (64, 32) rows 0:32 = Wk_blockdiag.T, rows 32:64 = fc_out.weight.T
                 wff_ref,            # (64,128) rows 0:32 = W1.T, rows 32:64 = W2 (PyTorch layout)
                 hwl_ref,            # (32,128) fc1(+BN) weight, [e, s*16+f]
                 slab_ref,           # (8, 128) packed bias/LN vectors
                 out_ref):           # (2, 16)
    f32 = jnp.float32
    it = jnp.int32

    # ---- embeddings: gather as a one-hot matmul (tiny vocab) + positional add ----
    vi = jax.lax.broadcasted_iota(it, (NT, VOCAB_PAD), 1)
    onehot = (src_col_ref[...] == vi).astype(f32)                       # (16, 64)
    x = jnp.dot(onehot, word_ref[...], preferred_element_type=f32)       # (16, 32)
    pos = pos_ref[...]
    x = x + jnp.concatenate([pos, pos], axis=0)                          # batch-major: row r -> pos r%8
    # TODO(synk): nn.Dropout(p=0.5) layers are identity here (eval-mode forward).

    # ---- projections: one fused Q|V matmul (lane-major) + one row-major K matmul ----
    qv = jnp.dot(x, wqv_ref[...], preferred_element_type=f32)            # (16, 64): lanes 0:32 q*scale, 32:64 v
    wko = wko_ref[...]                                                   # (64, 32)
    kx = jax.lax.dot_general(wko, x, (((1,), (1,)), ((), ())),
                             preferred_element_type=f32)                 # (64, 16): rows 0:32 = k.T (rest unused)

    # ---- all-head energies stacked on sublanes: E[h*16 + i, j] = energy_h[i, j] / sqrt(E) ----
    ROWS = HEADS * NT                                                    # 64
    q4 = jnp.concatenate([qv, qv, qv, qv], axis=0)                       # (64, 64)
    ri = jax.lax.broadcasted_iota(it, (ROWS, 2 * EMBED), 0)
    li = jax.lax.broadcasted_iota(it, (ROWS, 2 * EMBED), 1)
    qmask = jnp.right_shift(li, 3) == jnp.right_shift(ri, 4)             # lane//8 == row//16 (head id)
    qbig = jnp.where(qmask, q4, 0.0)                                     # only the q lanes of head h survive
    e = jnp.dot(qbig, kx, preferred_element_type=f32)                    # (64, 16)

    # mask: same-batch block + key padding (src == 0); exact masked_fill parity
    ri2 = jax.lax.broadcasted_iota(it, (ROWS, NT), 0)
    cj = jax.lax.broadcasted_iota(it, (ROWS, NT), 1)
    same_b = jnp.bitwise_and(jnp.right_shift(ri2, 3), 1) == jnp.right_shift(cj, 3)
    key_ok = src_row_ref[...] != 0                                       # (1, 16)
    e = jnp.where(jnp.logical_and(same_b, key_ok), e, MASKVAL)

    # one exact softmax for all 4 heads (rows are head-stacked)
    m = jnp.max(e, axis=-1, keepdims=True)
    p = jnp.exp(e - m)
    a = p / jnp.sum(p, axis=-1, keepdims=True)                           # (64, 16)

    # ---- attention @ V and fc_out: heads selected by VPU masks, no lane slices ----
    li_v = jax.lax.broadcasted_iota(it, (NT, 2 * EMBED), 1)
    attn = jnp.zeros((NT, 2 * EMBED), f32)
    for h in range(HEADS):
        a_h = a[h * NT:(h + 1) * NT, :]                                  # free sublane slice (16, 16)
        v_h = jnp.where(jnp.right_shift(li_v, 3) == (HEADS + h), qv, 0.0)  # keep v lanes of head h
        attn = attn + jnp.dot(a_h, v_h, preferred_element_type=f32)       # (16, 64); lanes 0:32 stay zero
    # lanes 0:32 of attn are zero, so the Wk rows of wko contribute nothing.
    attn_out = jnp.dot(attn, wko, preferred_element_type=f32) + slab_ref[0:1, 0:EMBED]

    def layernorm(y, g, b):
        mu = jnp.mean(y, axis=-1, keepdims=True)
        var = jnp.mean((y - mu) ** 2, axis=-1, keepdims=True)
        return (y - mu) * jax.lax.rsqrt(var + LN_EPS) * g + b

    x1 = layernorm(attn_out + x, slab_ref[1:2, 0:EMBED], slab_ref[2:3, 0:EMBED])

    # ---- feed-forward (weights packed in one lane-dense (64,128) slab) ----
    h1 = jnp.maximum(
        jnp.dot(x1, wff_ref[0:EMBED, :], preferred_element_type=f32) + slab_ref[6:7, :], 0.0)  # (16, 128)
    ff = jax.lax.dot_general(h1, wff_ref[EMBED:2 * EMBED, :], (((1,), (1,)), ((), ())),
                             preferred_element_type=f32) + slab_ref[3:4, 0:EMBED]
    x2 = layernorm(ff + x1, slab_ref[4:5, 0:EMBED], slab_ref[5:6, 0:EMBED])                     # (16, 32)

    # ---- head: flatten-free fc1 + BatchNorm1d(eval) ----
    # P[r, s*16 + f] = sum_e x2[r, e] * fc1bn_w[f, s*32 + e]
    p_all = jnp.dot(x2, hwl_ref[...], preferred_element_type=f32)        # (16, 128)
    r16 = jax.lax.broadcasted_iota(it, (NT, HEAD_COLS), 0)
    c128 = jax.lax.broadcasted_iota(it, (NT, HEAD_COLS), 1)
    keep = jnp.right_shift(c128, 4) == jnp.bitwise_and(r16, 7)           # lane block s == row's position (r % 8)
    p_sel = jnp.where(keep, p_all, 0.0)
    ci = jax.lax.broadcasted_iota(it, (HEAD_COLS, FEAT), 0)
    fi = jax.lax.broadcasted_iota(it, (HEAD_COLS, FEAT), 1)
    fold_s = (jnp.bitwise_and(ci, 15) == fi).astype(f32)                 # (128, 16): sum the 8 lane blocks
    feat_rows = jnp.dot(p_sel, fold_s, preferred_element_type=f32)       # (16, 16): per-token contribution
    bi = jax.lax.broadcasted_iota(it, (N, NT), 0)
    rj = jax.lax.broadcasted_iota(it, (N, NT), 1)
    fold_b = (jnp.right_shift(rj, 3) == bi).astype(f32)                  # (2, 16): sum rows of each batch
    out_ref[...] = jnp.dot(fold_b, feat_rows, preferred_element_type=f32) + slab_ref[7:8, 0:FEAT]


# ---------------- parameter init (deterministic, PyTorch layouts) ------------
def init_params(key):
    ks = jax.random.split(key, 12)
    s = 0.05
    p = {}
    p["word_emb"] = s * jax.random.normal(ks[0], (VOCAB, EMBED), jnp.float32)
    p["pos_emb"] = s * jax.random.normal(ks[1], (MAX_LEN, EMBED), jnp.float32)
    # SelfAttention
    p["wq"] = s * jax.random.normal(ks[2], (HEAD_DIM, HEAD_DIM), jnp.float32)
    p["wk"] = s * jax.random.normal(ks[3], (HEAD_DIM, HEAD_DIM), jnp.float32)
    p["wv"] = s * jax.random.normal(ks[4], (HEAD_DIM, HEAD_DIM), jnp.float32)
    p["wo"] = s * jax.random.normal(ks[5], (EMBED, EMBED), jnp.float32)
    p["bo"] = jnp.zeros((1, EMBED), jnp.float32)
    # LayerNorms
    p["g1"] = jnp.ones((1, EMBED), jnp.float32)
    p["be1"] = jnp.zeros((1, EMBED), jnp.float32)
    p["g2"] = jnp.ones((1, EMBED), jnp.float32)
    p["be2"] = jnp.zeros((1, EMBED), jnp.float32)
    # FFN
    p["w1"] = s * jax.random.normal(ks[6], (FF, EMBED), jnp.float32)
    p["b1"] = jnp.zeros((1, FF), jnp.float32)
    p["w2"] = s * jax.random.normal(ks[7], (EMBED, FF), jnp.float32)
    p["b2"] = jnp.zeros((1, EMBED), jnp.float32)
    # head: fc1 + BatchNorm1d (running stats, eval mode)
    p["fc1_w"] = s * jax.random.normal(ks[8], (FEAT, MAX_LEN * EMBED), jnp.float32)
    p["fc1_b"] = jnp.zeros((1, FEAT), jnp.float32)
    p["bn_g"] = jnp.ones((1, FEAT), jnp.float32)
    p["bn_b"] = jnp.zeros((1, FEAT), jnp.float32)
    p["bn_m"] = jnp.zeros((1, FEAT), jnp.float32)
    p["bn_v"] = jnp.ones((1, FEAT), jnp.float32)
    return p


# ---------------- one-time parameter preparation (hoisted out of forward) ----
def prepare_params(p):
    eye = jnp.eye(HEADS, dtype=jnp.float32)
    scale = 1.0 / math.sqrt(EMBED)                    # softmax scale uses embed_size (as in PyTorch)

    wq_bd = jnp.kron(eye, p["wq"].T) * scale          # (E, E) block-diagonal, scale folded
    wv_bd = jnp.kron(eye, p["wv"].T)
    wk_rows = jnp.kron(eye, p["wk"])                  # = Wk_blockdiag.T (row-major k projection)
    w_qv = jnp.concatenate([wq_bd, wv_bd], axis=1)    # (32, 64)
    w_ko = jnp.concatenate([wk_rows, p["wo"].T], axis=0)    # (64, 32)
    w_ff = jnp.concatenate([p["w1"].T, p["w2"]], axis=0)    # (64, 128): W1.T | W2 (both lane-dense)

    # fc1 + BatchNorm1d (eval) folded; re-laid as (E, S*FEAT) so the head is lane-dense
    bn_s = p["bn_g"] / jnp.sqrt(p["bn_v"] + BN_EPS)         # (1, FEAT)
    hw_scaled = p["fc1_w"] * bn_s[0][:, None]               # (FEAT, S*E)
    hw_lane = hw_scaled.reshape(FEAT, MAX_LEN, EMBED).transpose(2, 1, 0).reshape(EMBED, HEAD_COLS)
    head_b = (p["fc1_b"] - p["bn_m"]) * bn_s + p["bn_b"]    # (1, FEAT)

    # all small bias / LN vectors packed into one (8, 128) slab
    slab = jnp.zeros((8, FF), jnp.float32)
    slab = slab.at[0, :EMBED].set(p["bo"][0])
    slab = slab.at[1, :EMBED].set(p["g1"][0])
    slab = slab.at[2, :EMBED].set(p["be1"][0])
    slab = slab.at[3, :EMBED].set(p["b2"][0])
    slab = slab.at[4, :EMBED].set(p["g2"][0])
    slab = slab.at[5, :EMBED].set(p["be2"][0])
    slab = slab.at[6, :].set(p["b1"][0])
    slab = slab.at[7, :FEAT].set(head_b[0])

    word_pad = jnp.zeros((VOCAB_PAD, EMBED), jnp.float32).at[:VOCAB].set(p["word_emb"])

    return {"word_pad": word_pad, "pos_emb": p["pos_emb"],
            "w_qv": w_qv, "w_ko": w_ko, "w_ff": w_ff,
            "hw_lane": hw_lane, "slab": slab}


# ---------------- wrapper -----------------------------------------------------
def transformer_forward(src, prep):
    n, S = src.shape
    assert n == N and S == MAX_LEN
    # only per-call data: two tiny int32 views of src (batch-major flatten)
    src_row = src.reshape(1, n * S).astype(jnp.int32)
    src_col = src.reshape(n * S, 1).astype(jnp.int32)
    return pl.pallas_call(
        fused_kernel,
        out_shape=jax.ShapeDtypeStruct((n, FEAT), jnp.float32),
    )(src_row, src_col,
      prep["word_pad"], prep["pos_emb"],
      prep["w_qv"], prep["w_ko"], prep["w_ff"],
      prep["hw_lane"], prep["slab"])


if __name__ == "__main__":
    key = jax.random.PRNGKey(0)
    pkey, dkey = jax.random.split(key)
    params = init_params(pkey)
    prep = prepare_params(params)

    # tokens in [0, VOCAB); force a couple of pad (0) tokens so the mask matters
    src = jax.random.randint(dkey, (N, MAX_LEN), 0, VOCAB)
    src = src.at[0, -2:].set(0).at[1, -1:].set(0)

    fwd = jax.jit(transformer_forward)
    out = jax.block_until_ready(fwd(src, prep))
    assert out.shape == (N, FEAT) and out.dtype == jnp.float32
    assert bool(jnp.all(jnp.isfinite(out)))
    print("KERNEL_OK")
</pallas_src>

<mosaic_0001>
module attributes {stable_mosaic.version = 11 : i64} {
  func.func @fused_kernel(%arg0: memref<1x16xi32, #tpu.memory_space<vmem>>, %arg1: memref<16x1xi32, #tpu.memory_space<vmem>>, %arg2: memref<64x32xf32, #tpu.memory_space<vmem>>, %arg3: memref<8x32xf32, #tpu.memory_space<vmem>>, %arg4: memref<32x64xf32, #tpu.memory_space<vmem>>, %arg5: memref<64x32xf32, #tpu.memory_space<vmem>>, %arg6: memref<64x128xf32, #tpu.memory_space<vmem>>, %arg7: memref<32x128xf32, #tpu.memory_space<vmem>>, %arg8: memref<8x128xf32, #tpu.memory_space<vmem>>, %arg9: memref<2x16xf32, #tpu.memory_space<vmem>>) attributes {dimension_semantics = [], scalar_prefetch = 0 : i64, scratch_operands = 0 : i64, tpu.core_type = #tpu.core_type<tc>} {
    %0 = tpu.iota {dimensions = array<i32: 1>} : vector<16x64xi32>
    %c0 = arith.constant 0 : index
    %c0_0 = arith.constant 0 : index
    %1 = vector.load %arg1[%c0, %c0_0] : memref<16x1xi32, #tpu.memory_space<vmem>>, vector<16x1xi32>
    %2 = vector.broadcast %1 : vector<16x1xi32> to vector<16x64xi32>
    %3 = arith.cmpi eq, %2, %0 : vector<16x64xi32>
    %4 = arith.extui %3 : vector<16x64xi1> to vector<16x64xi32>
    %5 = arith.sitofp %4 : vector<16x64xi32> to vector<16x64xf32>
    %c0_1 = arith.constant 0 : index
    %c0_2 = arith.constant 0 : index
    %6 = vector.load %arg2[%c0_1, %c0_2] : memref<64x32xf32, #tpu.memory_space<vmem>>, vector<64x32xf32>
    %cst = arith.constant dense<0.000000e+00> : vector<16x32xf32>
    %7 = tpu.matmul %5, %6, %cst {dimension_numbers = #tpu.dot_dimension_numbers<[1], [0], [0], [1], [0, 0, 1, 1], [], []>} : vector<16x64xf32>, vector<64x32xf32>, vector<16x32xf32> -> vector<16x32xf32>
    %c0_3 = arith.constant 0 : index
    %c0_4 = arith.constant 0 : index
    %8 = vector.load %arg3[%c0_3, %c0_4] : memref<8x32xf32, #tpu.memory_space<vmem>>, vector<8x32xf32>
    %9 = tpu.concatenate %8, %8 in 0 : vector<8x32xf32>, vector<8x32xf32> -> vector<16x32xf32>
    %10 = arith.addf %7, %9 : vector<16x32xf32>
    %c0_5 = arith.constant 0 : index
    %c0_6 = arith.constant 0 : index
    %11 = vector.load %arg4[%c0_5, %c0_6] : memref<32x64xf32, #tpu.memory_space<vmem>>, vector<32x64xf32>
    %cst_7 = arith.constant dense<0.000000e+00> : vector<16x64xf32>
    %12 = tpu.matmul %10, %11, %cst_7 {dimension_numbers = #tpu.dot_dimension_numbers<[1], [0], [0], [1], [0, 0, 1, 1], [], []>} : vector<16x32xf32>, vector<32x64xf32>, vector<16x64xf32> -> vector<16x64xf32>
    %c0_8 = arith.constant 0 : index
    %c0_9 = arith.constant 0 : index
    %13 = vector.load %arg5[%c0_8, %c0_9] : memref<64x32xf32, #tpu.memory_space<vmem>>, vector<64x32xf32>
    %cst_10 = arith.constant dense<0.000000e+00> : vector<64x16xf32>
    %14 = tpu.matmul %13, %10, %cst_10 {dimension_numbers = #tpu.dot_dimension_numbers<[1], [1], [0], [0], [0, 0, 1, 0], [], []>} : vector<64x32xf32>, vector<16x32xf32>, vector<64x16xf32> -> vector<64x16xf32>
    %15 = tpu.concatenate %12, %12, %12, %12 in 0 : vector<16x64xf32>, vector<16x64xf32>, vector<16x64xf32>, vector<16x64xf32> -> vector<64x64xf32>
    %16 = tpu.iota {dimensions = array<i32: 0>} : vector<64x64xi32>
    %17 = tpu.iota {dimensions = array<i32: 1>} : vector<64x64xi32>
    %c3_i32 = arith.constant 3 : i32
    %18 = vector.broadcast %c3_i32 : i32 to vector<64x64xi32>
    %19 = arith.shrsi %17, %18 : vector<64x64xi32>
    %c4_i32 = arith.constant 4 : i32
    %20 = vector.broadcast %c4_i32 : i32 to vector<64x64xi32>
    %21 = arith.shrsi %16, %20 : vector<64x64xi32>
    %22 = arith.cmpi eq, %19, %21 : vector<64x64xi32>
    %cst_11 = arith.constant 0.000000e+00 : f32
    %23 = vector.broadcast %cst_11 : f32 to vector<64x64xf32>
    %24 = arith.select %22, %15, %23 : vector<64x64xi1>, vector<64x64xf32>
    %cst_12 = arith.constant dense<0.000000e+00> : vector<64x16xf32>
    %25 = tpu.matmul %24, %14, %cst_12 {dimension_numbers = #tpu.dot_dimension_numbers<[1], [0], [0], [1], [0, 0, 1, 1], [], []>} : vector<64x64xf32>, vector<64x16xf32>, vector<64x16xf32> -> vector<64x16xf32>
    %26 = tpu.iota {dimensions = array<i32: 0>} : vector<64x16xi32>
    %27 = tpu.iota {dimensions = array<i32: 1>} : vector<64x16xi32>
    %c3_i32_13 = arith.constant 3 : i32
    %28 = vector.broadcast %c3_i32_13 : i32 to vector<64x16xi32>
    %29 = arith.shrsi %26, %28 : vector<64x16xi32>
    %c1_i32 = arith.constant 1 : i32
    %30 = vector.broadcast %c1_i32 : i32 to vector<64x16xi32>
    %31 = arith.andi %29, %30 : vector<64x16xi32>
    %c3_i32_14 = arith.constant 3 : i32
    %32 = vector.broadcast %c3_i32_14 : i32 to vector<64x16xi32>
    %33 = arith.shrsi %27, %32 : vector<64x16xi32>
    %34 = arith.cmpi eq, %31, %33 : vector<64x16xi32>
    %c0_15 = arith.constant 0 : index
    %c0_16 = arith.constant 0 : index
    %35 = vector.load %arg0[%c0_15, %c0_16] : memref<1x16xi32, #tpu.memory_space<vmem>>, vector<1x16xi32>
    %c0_i32 = arith.constant 0 : i32
    %36 = vector.broadcast %c0_i32 : i32 to vector<1x16xi32>
    %37 = arith.cmpi ne, %35, %36 : vector<1x16xi32>
    %38 = vector.broadcast %37 : vector<1x16xi1> to vector<64x16xi1>
    %39 = arith.andi %34, %38 : vector<64x16xi1>
    %cst_17 = arith.constant -1.76776698E+19 : f32
    %40 = vector.broadcast %cst_17 : f32 to vector<64x16xf32>
    %41 = arith.select %39, %25, %40 : vector<64x16xi1>, vector<64x16xf32>
    %cst_18 = arith.constant dense<0xFF800000> : vector<64xf32>
    %42 = vector.multi_reduction <maximumf>, %41, %cst_18 [1] : vector<64x16xf32> to vector<64xf32>
    %43 = vector.shape_cast %42 : vector<64xf32> to vector<64x1xf32>
    %44 = vector.broadcast %43 : vector<64x1xf32> to vector<64x16xf32>
    %45 = arith.subf %41, %44 : vector<64x16xf32>
    %46 = math.exp %45 : vector<64x16xf32>
    %cst_19 = arith.constant dense<0.000000e+00> : vector<64xf32>
    %47 = vector.multi_reduction <add>, %46, %cst_19 [1] : vector<64x16xf32> to vector<64xf32>
    %48 = vector.shape_cast %47 : vector<64xf32> to vector<64x1xf32>
    %49 = vector.broadcast %48 : vector<64x1xf32> to vector<64x16xf32>
    %50 = arith.divf %46, %49 : vector<64x16xf32>
    %51 = tpu.iota {dimensions = array<i32: 1>} : vector<16x64xi32>
    %cst_20 = arith.constant 0.000000e+00 : f32
    %52 = vector.broadcast %cst_20 : f32 to vector<16x64xf32>
    %53 = vector.extract_strided_slice %50 {offsets = [0, 0], sizes = [16, 16], strides = [1, 1]} : vector<64x16xf32> to vector<16x16xf32>
    %c3_i32_21 = arith.constant 3 : i32
    %54 = vector.broadcast %c3_i32_21 : i32 to vector<16x64xi32>
    %55 = arith.shrsi %51, %54 : vector<16x64xi32>
    %c4_i32_22 = arith.constant 4 : i32
    %56 = vector.broadcast %c4_i32_22 : i32 to vector<16x64xi32>
    %57 = arith.cmpi eq, %55, %56 : vector<16x64xi32>
    %cst_23 = arith.constant 0.000000e+00 : f32
    %58 = vector.broadcast %cst_23 : f32 to vector<16x64xf32>
    %59 = arith.select %57, %12, %58 : vector<16x64xi1>, vector<16x64xf32>
    %cst_24 = arith.constant dense<0.000000e+00> : vector<16x64xf32>
    %60 = tpu.matmul %53, %59, %cst_24 {dimension_numbers = #tpu.dot_dimension_numbers<[1], [0], [0], [1], [0, 0, 1, 1], [], []>} : vector<16x16xf32>, vector<16x64xf32>, vector<16x64xf32> -> vector<16x64xf32>
    %61 = arith.addf %52, %60 : vector<16x64xf32>
    %62 = vector.extract_strided_slice %50 {offsets = [16, 0], sizes = [16, 16], strides = [1, 1]} : vector<64x16xf32> to vector<16x16xf32>
    %c3_i32_25 = arith.constant 3 : i32
    %63 = vector.broadcast %c3_i32_25 : i32 to vector<16x64xi32>
    %64 = arith.shrsi %51, %63 : vector<16x64xi32>
    %c5_i32 = arith.constant 5 : i32
    %65 = vector.broadcast %c5_i32 : i32 to vector<16x64xi32>
    %66 = arith.cmpi eq, %64, %65 : vector<16x64xi32>
    %cst_26 = arith.constant 0.000000e+00 : f32
    %67 = vector.broadcast %cst_26 : f32 to vector<16x64xf32>
    %68 = arith.select %66, %12, %67 : vector<16x64xi1>, vector<16x64xf32>
    %cst_27 = arith.constant dense<0.000000e+00> : vector<16x64xf32>
    %69 = tpu.matmul %62, %68, %cst_27 {dimension_numbers = #tpu.dot_dimension_numbers<[1], [0], [0], [1], [0, 0, 1, 1], [], []>} : vector<16x16xf32>, vector<16x64xf32>, vector<16x64xf32> -> vector<16x64xf32>
    %70 = arith.addf %61, %69 : vector<16x64xf32>
    %71 = vector.extract_strided_slice %50 {offsets = [32, 0], sizes = [16, 16], strides = [1, 1]} : vector<64x16xf32> to vector<16x16xf32>
    %c3_i32_28 = arith.constant 3 : i32
    %72 = vector.broadcast %c3_i32_28 : i32 to vector<16x64xi32>
    %73 = arith.shrsi %51, %72 : vector<16x64xi32>
    %c6_i32 = arith.constant 6 : i32
    %74 = vector.broadcast %c6_i32 : i32 to vector<16x64xi32>
    %75 = arith.cmpi eq, %73, %74 : vector<16x64xi32>
    %cst_29 = arith.constant 0.000000e+00 : f32
    %76 = vector.broadcast %cst_29 : f32 to vector<16x64xf32>
    %77 = arith.select %75, %12, %76 : vector<16x64xi1>, vector<16x64xf32>
    %cst_30 = arith.constant dense<0.000000e+00> : vector<16x64xf32>
    %78 = tpu.matmul %71, %77, %cst_30 {dimension_numbers = #tpu.dot_dimension_numbers<[1], [0], [0], [1], [0, 0, 1, 1], [], []>} : vector<16x16xf32>, vector<16x64xf32>, vector<16x64xf32> -> vector<16x64xf32>
    %79 = arith.addf %70, %78 : vector<16x64xf32>
    %80 = vector.extract_strided_slice %50 {offsets = [48, 0], sizes = [16, 16], strides = [1, 1]} : vector<64x16xf32> to vector<16x16xf32>
    %c3_i32_31 = arith.constant 3 : i32
    %81 = vector.broadcast %c3_i32_31 : i32 to vector<16x64xi32>
    %82 = arith.shrsi %51, %81 : vector<16x64xi32>
    %c7_i32 = arith.constant 7 : i32
    %83 = vector.broadcast %c7_i32 : i32 to vector<16x64xi32>
    %84 = arith.cmpi eq, %82, %83 : vector<16x64xi32>
    %cst_32 = arith.constant 0.000000e+00 : f32
    %85 = vector.broadcast %cst_32 : f32 to vector<16x64xf32>
    %86 = arith.select %84, %12, %85 : vector<16x64xi1>, vector<16x64xf32>
    %cst_33 = arith.constant dense<0.000000e+00> : vector<16x64xf32>
    %87 = tpu.matmul %80, %86, %cst_33 {dimension_numbers = #tpu.dot_dimension_numbers<[1], [0], [0], [1], [0, 0, 1, 1], [], []>} : vector<16x16xf32>, vector<16x64xf32>, vector<16x64xf32> -> vector<16x64xf32>
    %88 = arith.addf %79, %87 : vector<16x64xf32>
    %cst_34 = arith.constant dense<0.000000e+00> : vector<16x32xf32>
    %89 = tpu.matmul %88, %13, %cst_34 {dimension_numbers = #tpu.dot_dimension_numbers<[1], [0], [0], [1], [0, 0, 1, 1], [], []>} : vector<16x64xf32>, vector<64x32xf32>, vector<16x32xf32> -> vector<16x32xf32>
    %c0_35 = arith.constant 0 : index
    %c0_36 = arith.constant 0 : index
    %90 = vector.load %arg8[%c0_35, %c0_36] : memref<8x128xf32, #tpu.memory_space<vmem>>, vector<1x32xf32>
    %91 = vector.broadcast %90 : vector<1x32xf32> to vector<16x32xf32>
    %92 = arith.addf %89, %91 : vector<16x32xf32>
    %93 = arith.addf %92, %10 : vector<16x32xf32>
    %c1 = arith.constant 1 : index
    %c0_37 = arith.constant 0 : index
    %94 = vector.load %arg8[%c1, %c0_37] : memref<8x128xf32, #tpu.memory_space<vmem>>, vector<1x32xf32>
    %c2 = arith.constant 2 : index
    %c0_38 = arith.constant 0 : index
    %95 = vector.load %arg8[%c2, %c0_38] : memref<8x128xf32, #tpu.memory_space<vmem>>, vector<1x32xf32>
    %cst_39 = arith.constant dense<0.000000e+00> : vector<16xf32>
    %96 = vector.multi_reduction <add>, %93, %cst_39 [1] : vector<16x32xf32> to vector<16xf32>
    %97 = vector.shape_cast %96 : vector<16xf32> to vector<16x1xf32>
    %cst_40 = arith.constant 3.200000e+01 : f32
    %98 = vector.broadcast %cst_40 : f32 to vector<16x1xf32>
    %99 = arith.divf %97, %98 : vector<16x1xf32>
    %100 = vector.broadcast %99 : vector<16x1xf32> to vector<16x32xf32>
    %101 = arith.subf %93, %100 : vector<16x32xf32>
    %102 = arith.mulf %101, %101 : vector<16x32xf32>
    %cst_41 = arith.constant dense<0.000000e+00> : vector<16xf32>
    %103 = vector.multi_reduction <add>, %102, %cst_41 [1] : vector<16x32xf32> to vector<16xf32>
    %104 = vector.shape_cast %103 : vector<16xf32> to vector<16x1xf32>
    %cst_42 = arith.constant 3.200000e+01 : f32
    %105 = vector.broadcast %cst_42 : f32 to vector<16x1xf32>
    %106 = arith.divf %104, %105 : vector<16x1xf32>
    %107 = vector.broadcast %99 : vector<16x1xf32> to vector<16x32xf32>
    %108 = arith.subf %93, %107 : vector<16x32xf32>
    %cst_43 = arith.constant 9.99999974E-6 : f32
    %109 = vector.broadcast %cst_43 : f32 to vector<16x1xf32>
    %110 = arith.addf %106, %109 : vector<16x1xf32>
    %111 = math.rsqrt %110 : vector<16x1xf32>
    %112 = vector.broadcast %111 : vector<16x1xf32> to vector<16x32xf32>
    %113 = arith.mulf %108, %112 : vector<16x32xf32>
    %114 = vector.broadcast %94 : vector<1x32xf32> to vector<16x32xf32>
    %115 = arith.mulf %113, %114 : vector<16x32xf32>
    %116 = vector.broadcast %95 : vector<1x32xf32> to vector<16x32xf32>
    %117 = arith.addf %115, %116 : vector<16x32xf32>
    %c0_44 = arith.constant 0 : index
    %c0_45 = arith.constant 0 : index
    %118 = vector.load %arg6[%c0_44, %c0_45] : memref<64x128xf32, #tpu.memory_space<vmem>>, vector<32x128xf32>
    %cst_46 = arith.constant dense<0.000000e+00> : vector<16x128xf32>
    %119 = tpu.matmul %117, %118, %cst_46 {dimension_numbers = #tpu.dot_dimension_numbers<[1], [0], [0], [1], [0, 0, 1, 1], [], []>} : vector<16x32xf32>, vector<32x128xf32>, vector<16x128xf32> -> vector<16x128xf32>
    %c6 = arith.constant 6 : index
    %c0_47 = arith.constant 0 : index
    %120 = vector.load %arg8[%c6, %c0_47] : memref<8x128xf32, #tpu.memory_space<vmem>>, vector<1x128xf32>
    %121 = vector.broadcast %120 : vector<1x128xf32> to vector<16x128xf32>
    %122 = arith.addf %119, %121 : vector<16x128xf32>
    %cst_48 = arith.constant 0.000000e+00 : f32
    %123 = vector.broadcast %cst_48 : f32 to vector<16x128xf32>
    %124 = arith.maximumf %122, %123 : vector<16x128xf32>
    %c32 = arith.constant 32 : index
    %c0_49 = arith.constant 0 : index
    %125 = vector.load %arg6[%c32, %c0_49] : memref<64x128xf32, #tpu.memory_space<vmem>>, vector<32x128xf32>
    %cst_50 = arith.constant dense<0.000000e+00> : vector<16x32xf32>
    %126 = tpu.matmul %124, %125, %cst_50 {dimension_numbers = #tpu.dot_dimension_numbers<[1], [1], [0], [0], [0, 0, 1, 0], [], []>} : vector<16x128xf32>, vector<32x128xf32>, vector<16x32xf32> -> vector<16x32xf32>
    %c3 = arith.constant 3 : index
    %c0_51 = arith.constant 0 : index
    %127 = vector.load %arg8[%c3, %c0_51] : memref<8x128xf32, #tpu.memory_space<vmem>>, vector<1x32xf32>
    %128 = vector.broadcast %127 : vector<1x32xf32> to vector<16x32xf32>
    %129 = arith.addf %126, %128 : vector<16x32xf32>
    %130 = arith.addf %129, %117 : vector<16x32xf32>
    %c4 = arith.constant 4 : index
    %c0_52 = arith.constant 0 : index
    %131 = vector.load %arg8[%c4, %c0_52] : memref<8x128xf32, #tpu.memory_space<vmem>>, vector<1x32xf32>
    %c5 = arith.constant 5 : index
    %c0_53 = arith.constant 0 : index
    %132 = vector.load %arg8[%c5, %c0_53] : memref<8x128xf32, #tpu.memory_space<vmem>>, vector<1x32xf32>
    %cst_54 = arith.constant dense<0.000000e+00> : vector<16xf32>
    %133 = vector.multi_reduction <add>, %130, %cst_54 [1] : vector<16x32xf32> to vector<16xf32>
    %134 = vector.shape_cast %133 : vector<16xf32> to vector<16x1xf32>
    %cst_55 = arith.constant 3.200000e+01 : f32
    %135 = vector.broadcast %cst_55 : f32 to vector<16x1xf32>
    %136 = arith.divf %134, %135 : vector<16x1xf32>
    %137 = vector.broadcast %136 : vector<16x1xf32> to vector<16x32xf32>
    %138 = arith.subf %130, %137 : vector<16x32xf32>
    %139 = arith.mulf %138, %138 : vector<16x32xf32>
    %cst_56 = arith.constant dense<0.000000e+00> : vector<16xf32>
    %140 = vector.multi_reduction <add>, %139, %cst_56 [1] : vector<16x32xf32> to vector<16xf32>
    %141 = vector.shape_cast %140 : vector<16xf32> to vector<16x1xf32>
    %cst_57 = arith.constant 3.200000e+01 : f32
    %142 = vector.broadcast %cst_57 : f32 to vector<16x1xf32>
    %143 = arith.divf %141, %142 : vector<16x1xf32>
    %144 = vector.broadcast %136 : vector<16x1xf32> to vector<16x32xf32>
    %145 = arith.subf %130, %144 : vector<16x32xf32>
    %cst_58 = arith.constant 9.99999974E-6 : f32
    %146 = vector.broadcast %cst_58 : f32 to vector<16x1xf32>
    %147 = arith.addf %143, %146 : vector<16x1xf32>
    %148 = math.rsqrt %147 : vector<16x1xf32>
    %149 = vector.broadcast %148 : vector<16x1xf32> to vector<16x32xf32>
    %150 = arith.mulf %145, %149 : vector<16x32xf32>
    %151 = vector.broadcast %131 : vector<1x32xf32> to vector<16x32xf32>
    %152 = arith.mulf %150, %151 : vector<16x32xf32>
    %153 = vector.broadcast %132 : vector<1x32xf32> to vector<16x32xf32>
    %154 = arith.addf %152, %153 : vector<16x32xf32>
    %c0_59 = arith.constant 0 : index
    %c0_60 = arith.constant 0 : index
    %155 = vector.load %arg7[%c0_59, %c0_60] : memref<32x128xf32, #tpu.memory_space<vmem>>, vector<32x128xf32>
    %cst_61 = arith.constant dense<0.000000e+00> : vector<16x128xf32>
    %156 = tpu.matmul %154, %155, %cst_61 {dimension_numbers = #tpu.dot_dimension_numbers<[1], [0], [0], [1], [0, 0, 1, 1], [], []>} : vector<16x32xf32>, vector<32x128xf32>, vector<16x128xf32> -> vector<16x128xf32>
    %157 = tpu.iota {dimensions = array<i32: 0>} : vector<16x128xi32>
    %158 = tpu.iota {dimensions = array<i32: 1>} : vector<16x128xi32>
    %c4_i32_62 = arith.constant 4 : i32
    %159 = vector.broadcast %c4_i32_62 : i32 to vector<16x128xi32>
    %160 = arith.shrsi %158, %159 : vector<16x128xi32>
    %c7_i32_63 = arith.constant 7 : i32
    %161 = vector.broadcast %c7_i32_63 : i32 to vector<16x128xi32>
    %162 = arith.andi %157, %161 : vector<16x128xi32>
    %163 = arith.cmpi eq, %160, %162 : vector<16x128xi32>
    %cst_64 = arith.constant 0.000000e+00 : f32
    %164 = vector.broadcast %cst_64 : f32 to vector<16x128xf32>
    %165 = arith.select %163, %156, %164 : vector<16x128xi1>, vector<16x128xf32>
    %166 = tpu.iota {dimensions = array<i32: 0>} : vector<128x16xi32>
    %167 = tpu.iota {dimensions = array<i32: 1>} : vector<128x16xi32>
    %c15_i32 = arith.constant 15 : i32
    %168 = vector.broadcast %c15_i32 : i32 to vector<128x16xi32>
    %169 = arith.andi %166, %168 : vector<128x16xi32>
    %170 = arith.cmpi eq, %169, %167 : vector<128x16xi32>
    %171 = arith.extui %170 : vector<128x16xi1> to vector<128x16xi32>
    %172 = arith.sitofp %171 : vector<128x16xi32> to vector<128x16xf32>
    %cst_65 = arith.constant dense<0.000000e+00> : vector<16x16xf32>
    %173 = tpu.matmul %165, %172, %cst_65 {dimension_numbers = #tpu.dot_dimension_numbers<[1], [0], [0], [1], [0, 0, 1, 1], [], []>} : vector<16x128xf32>, vector<128x16xf32>, vector<16x16xf32> -> vector<16x16xf32>
    %174 = tpu.iota {dimensions = array<i32: 0>} : vector<2x16xi32>
    %175 = tpu.iota {dimensions = array<i32: 1>} : vector<2x16xi32>
    %c3_i32_66 = arith.constant 3 : i32
    %176 = vector.broadcast %c3_i32_66 : i32 to vector<2x16xi32>
    %177 = arith.shrsi %175, %176 : vector<2x16xi32>
    %178 = arith.cmpi eq, %177, %174 : vector<2x16xi32>
    %179 = arith.extui %178 : vector<2x16xi1> to vector<2x16xi32>
    %180 = arith.sitofp %179 : vector<2x16xi32> to vector<2x16xf32>
    %cst_67 = arith.constant dense<0.000000e+00> : vector<2x16xf32>
    %181 = tpu.matmul %180, %173, %cst_67 {dimension_numbers = #tpu.dot_dimension_numbers<[1], [0], [0], [1], [0, 0, 1, 1], [], []>} : vector<2x16xf32>, vector<16x16xf32>, vector<2x16xf32> -> vector<2x16xf32>
    %c7 = arith.constant 7 : index
    %c0_68 = arith.constant 0 : index
    %182 = vector.load %arg8[%c7, %c0_68] : memref<8x128xf32, #tpu.memory_space<vmem>>, vector<1x16xf32>
    %183 = vector.broadcast %182 : vector<1x16xf32> to vector<2x16xf32>
    %184 = arith.addf %181, %183 : vector<2x16xf32>
    %c0_69 = arith.constant 0 : index
    %c0_70 = arith.constant 0 : index
    %185 = vector.load %arg9[%c0_69, %c0_70] : memref<2x16xf32, #tpu.memory_space<vmem>>, vector<2x16xf32>
    tpu.vector_store %arg9[%c0_69, %c0_70], %184 {strides = array<i32>} : memref<2x16xf32, #tpu.memory_space<vmem>>, vector<2x16xf32>,
    return
  }
}

</mosaic_0001>

<llo_original>
// kernel: transformer_forward.1
$region0: #{transformer_forward.1}
  #allocation0 [shape = 'u32[]', space=smem, size = 0x4, offset = 0x4, fixed_abs, tag = 'smem constant byte address 0x4 - core index']
  #allocation1 [shape = 'u32[144,128]{1,0:T(1,128)}', space=vmem, size = 0x12000, scoped, tag = 'internal scratch']
  %s0 = inlined_call_operand.vmem [shape: s32[1,16], index: 0, kind: input, shape index: {}]
  %s1 = inlined_call_operand.vmem [shape: s32[16,1], index: 1, kind: input, shape index: {}]
  %s2 = inlined_call_operand.vmem [shape: f32[64,32], index: 2, kind: input, shape index: {}]
  %s3 = inlined_call_operand.vmem [shape: f32[8,32], index: 3, kind: input, shape index: {}]
  %s4 = inlined_call_operand.vmem [shape: f32[32,64], index: 4, kind: input, shape index: {}]
  %s5 = inlined_call_operand.vmem [shape: f32[64,32], index: 5, kind: input, shape index: {}]
  %s6 = inlined_call_operand.vmem [shape: f32[64,128], index: 6, kind: input, shape index: {}]
  %s7 = inlined_call_operand.vmem [shape: f32[32,128], index: 7, kind: input, shape index: {}]
  %s8 = inlined_call_operand.vmem [shape: f32[8,128], index: 8, kind: input, shape index: {}]
  %s9 = inlined_call_operand.hbm [shape: f32[2,16], index: 9, kind: output, shape index: {}]
  %s10 = sld [smem:[#allocation0]]
  $region46: #{transformer_forward.1} parent=0
    _
  %s12 = ssub.s32 1, %s10
  %s13 = scalar_select 0, %s12, %s10
  $region1: #{transformer_forward.1} parent=0
    #allocation2 [shape = 'u8[1024]{0}', space=vmem, size = 0x400, scoped, tag = 'output window, operand 0, single buffered']
    #allocation3 [shape = 's32[1]{0}', space=sflag, size = 0x4, scoped, tag = 'scoped memory for transformer_forward.1']
    %14 = vsyncpa [#allocation3], 0
    // Predicated region
    $region2: #{transformer_forward.1} parent=1 // pred_check
      _
    $region3: #{transformer_forward.1} parent=1 // pred_check_branch
      %16 = sbr.rel (0) target = $region5
    $region4: #{transformer_forward.1} parent=1 // pred_region
      _
    $region5: #{transformer_forward.1} parent=1 // pred_fallthru
      _
    // Predicated region
    $region6: #{transformer_forward.1} parent=1 // pred_check
      _
    $region7: #{transformer_forward.1} parent=1 // pred_check_branch
      %18 = sbr.rel (0) target = $region9
    $region8: #{transformer_forward.1} parent=1 // pred_region
      _
    $region9: #{transformer_forward.1} parent=1 // pred_fallthru
      _
    // Predicated region
    $region10: #{transformer_forward.1} parent=1 // pred_check
      _
    $region11: #{transformer_forward.1} parent=1 // pred_check_branch
      %20 = sbr.rel (0) target = $region13
    $region12: #{transformer_forward.1} parent=1 // pred_region
      _
    $region13: #{transformer_forward.1} parent=1 // pred_fallthru
      _
    // Predicated region
    $region14: #{transformer_forward.1} parent=1 // pred_check
      _
    $region15: #{transformer_forward.1} parent=1 // pred_check_branch
      %22 = sbr.rel (0) target = $region17
    $region16: #{transformer_forward.1} parent=1 // pred_region
      _
    $region17: #{transformer_forward.1} parent=1 // pred_fallthru
      _
    // Predicated region
    $region18: #{transformer_forward.1} parent=1 // pred_check
      _
    $region19: #{transformer_forward.1} parent=1 // pred_check_branch
      %24 = sbr.rel (0) target = $region21
    $region20: #{transformer_forward.1} parent=1 // pred_region
      _
    $region21: #{transformer_forward.1} parent=1 // pred_fallthru
      _
    // Predicated region
    $region22: #{transformer_forward.1} parent=1 // pred_check
      _
    $region23: #{transformer_forward.1} parent=1 // pred_check_branch
      %26 = sbr.rel (0) target = $region25
    $region24: #{transformer_forward.1} parent=1 // pred_region
      _
    $region25: #{transformer_forward.1} parent=1 // pred_fallthru
      _
    // Predicated region
    $region26: #{transformer_forward.1} parent=1 // pred_check
      _
    $region27: #{transformer_forward.1} parent=1 // pred_check_branch
      %28 = sbr.rel (0) target = $region29
    $region28: #{transformer_forward.1} parent=1 // pred_region
      _
    $region29: #{transformer_forward.1} parent=1 // pred_fallthru
      _
    // Predicated region
    $region30: #{transformer_forward.1} parent=1 // pred_check
      _
    $region31: #{transformer_forward.1} parent=1 // pred_check_branch
      %30 = sbr.rel (0) target = $region33
    $region32: #{transformer_forward.1} parent=1 // pred_region
      _
    $region33: #{transformer_forward.1} parent=1 // pred_fallthru
      _
    // Predicated region
    $region34: #{transformer_forward.1} parent=1 // pred_check
      _
    $region35: #{transformer_forward.1} parent=1 // pred_check_branch
      %32 = sbr.rel (0) target = $region37
    $region36: #{transformer_forward.1} parent=1 // pred_region
      _
    $region37: #{transformer_forward.1} parent=1 // pred_fallthru
      _
    %v33 = vlaneseq
    %v34 = vand.u32 %v33, 127
    %v35 = vld [vmem:[%s1] sm:$0xff]
    %v36 = vld [vmem:[%s1 + $0x8] sm:$0xff]
    %37 = vset.pattern.permute.xlu0 0
    %38 = vperm.xlu0 %37, %v35
    %v39 = vpop.permute.xlu0 %38
    %40 = vset.pattern.permute.xlu0 0
    %41 = vperm.xlu0 %40, %v36
    %v42 = vpop.permute.xlu0 %41
    %vm43 = vcmp.eq.s32.totalorder %v39, %v34
    %vm44 = vcmp.eq.s32.totalorder %v42, %v34
    %v45 = vsel %vm43, 1, 0
    %v46 = vsel %vm44, 1, 0
    %v47 = vcvt.s32.f32 %v45
    %v48 = vcvt.s32.f32 %v46
    %v49 = vld [vmem:[%s2] sm:$0xff]
    %v50 = vld [vmem:[%s2 + $0x8] sm:$0xff]
    %v51 = vld [vmem:[%s2 + $0x10] sm:$0xff]
    %v52 = vld [vmem:[%s2 + $0x18] sm:$0xff]
    %v53 = vld [vmem:[%s2 + $0x20] sm:$0xff]
    %v54 = vld [vmem:[%s2 + $0x28] sm:$0xff]
    %v55 = vld [vmem:[%s2 + $0x30] sm:$0xff]
    %v56 = vld [vmem:[%s2 + $0x38] sm:$0xff]
    %v57 = vld [vmem:[%s3] sm:$0xff]
    %vm58 = vcmask 523264
    %v60 = vsel %vm58, %v47, 0
    %v63 = vsel %vm58, %v48, 0
    %65 = vmatprep.subr.mxu0 0.0
    %66 = vmatpush1.msra.mxu0 %v49
    %67 = vmatprep.subr.mxu0 0.0
    %68 = vmatpush1.msra.mxu0 %v50
    %69 = vmatprep.subr.mxu0 0.0
    %70 = vmatpush1.msra.mxu0 %v51
    %71 = vmatprep.subr.mxu0 0.0
    %72 = vmatpush1.msra.mxu0 %v52
    %73 = vmatprep.subr.mxu0 0.0
    %74 = vmatpush1.msra.mxu0 %v53
    %75 = vmatprep.subr.mxu0 0.0
    %76 = vmatpush1.msra.mxu0 %v54
    %77 = vmatprep.subr.mxu0 0.0
    %78 = vmatpush1.msra.mxu0 %v55
    %79 = vmatprep.subr.mxu0 0.0
    %80 = vmatpush1.msra.mxu0 %v56
    %81 = vmatprep.subr.mxu0 0.0
    %82 = vmatpush1.msra.mxu0 0.0
    %83 = vmatprep.subr.mxu0 0.0
    %84 = vmatpush1.msra.mxu0 0.0
    %85 = vmatprep.subr.mxu0 0.0
    %86 = vmatpush1.msra.mxu0 0.0
    %87 = vmatprep.subr.mxu0 0.0
    %88 = vmatpush1.msra.mxu0 0.0
    %89 = vmatprep.subr.mxu0 0.0
    %90 = vmatpush1.msra.mxu0 0.0
    %91 = vmatprep.subr.mxu0 0.0
    %92 = vmatpush1.msra.mxu0 0.0
    %93 = vmatprep.subr.mxu0 0.0
    %94 = vmatpush1.msra.mxu0 0.0
    %95 = vmatprep.subr.mxu0 0.0
    %96 = vmatpush1.msra.mxu0 0.0
    %97 = vmatprep.subr.mxu0 0.0
    %98 = vmatpush1.msra.mxu0 0.0
    %99 = vmatprep.subr.mxu0 0.0
    %100 = vmatpush1.msra.mxu0 0.0
    %101 = vmatprep.subr.mxu0 0.0
    %102 = vmatpush1.msra.mxu0 0.0
    %103 = vmatprep.subr.mxu0 0.0
    %104 = vmatpush1.msra.mxu0 0.0
    %105 = vmatprep.subr.mxu0 0.0
    %106 = vmatpush1.msra.mxu0 0.0
    %107 = vmatprep.subr.mxu0 0.0
    %108 = vmatpush1.msra.mxu0 0.0
    %109 = vmatprep.subr.mxu0 0.0
    %110 = vmatpush1.msra.mxu0 0.0
    %111 = vmatprep.subr.mxu0 0.0
    %112 = vmatpush1.msra.mxu0 0.0
    %113 = vmatprep.subr.mxu0 0.0
    %114 = vmatpush1.msra.mxu0 0.0
    %115 = vmatprep.subr.mxu0 0.0
    %116 = vmatpush1.msra.mxu0 0.0
    %117 = vmatprep.subr.mxu0 0.0
    %118 = vmatpush1.msra.mxu0 0.0
    %119 = vmatprep.subr.mxu0 0.0
    %120 = vmatpush1.msra.mxu0 0.0
    %121 = vmatprep.subr.mxu0 0.0
    %122 = vmatpush1.msra.mxu0 0.0
    %123 = vmatprep.subr.mxu0 0.0
    %124 = vmatpush1.msra.mxu0 0.0
    %125 = vmatprep.subr.mxu0 0.0
    %126 = vmatpush1.msra.mxu0 0.0
    %127 = vmatprep.subr.mxu0 0.0
    %128 = vmatpush1.msra.mxu0 0.0
    %129 = vmatprep.mubr.f32.mxu0 0.0
    %130 = vmatmul.mubr.f32.gmra.mrb[0].mxu0 %v60
    %v131 = vpop.f32.mrb[0].mxu0
    %v132 = vadd.f32 %v57, %v131
    %v133 = vpop.f32.mrb[0].mxu0
    %134 = vmatprep.mubr.f32.mxu0 0.0
    %135 = vmatmul.mubr.f32.gmra.mrb[0].mxu0 %v63
    %v136 = vpop.f32.mrb[0].mxu0
    %v137 = vadd.f32 %v57, %v136
    %v138 = vpop.f32.mrb[0].mxu0
    %139 = vdwg.mxu0
    %v140 = vld [vmem:[%s4] sm:$0xff]
    %v141 = vld [vmem:[%s4 + $0x8] sm:$0xff]
    %v142 = vld [vmem:[%s4 + $0x10] sm:$0xff]
    %v143 = vld [vmem:[%s4 + $0x18] sm:$0xff]
    %vm144 = vcmask 261120
    %v146 = vsel %vm144, %v132, 0
    %v149 = vsel %vm144, %v137, 0
    %151 = vmatprep.subr.mxu0 0.0
    %152 = vmatpush1.msra.mxu0 %v140
    %153 = vmatprep.subr.mxu0 0.0
    %154 = vmatpush1.msra.mxu0 %v141
    %155 = vmatprep.subr.mxu0 0.0
    %156 = vmatpush1.msra.mxu0 %v142
    %157 = vmatprep.subr.mxu0 0.0
    %158 = vmatpush1.msra.mxu0 %v143
    %159 = vmatprep.subr.mxu0 0.0
    %160 = vmatpush1.msra.mxu0 0.0
    %161 = vmatprep.subr.mxu0 0.0
    %162 = vmatpush1.msra.mxu0 0.0
    %163 = vmatprep.subr.mxu0 0.0
    %164 = vmatpush1.msra.mxu0 0.0
    %165 = vmatprep.subr.mxu0 0.0
    %166 = vmatpush1.msra.mxu0 0.0
    %167 = vmatprep.subr.mxu0 0.0
    %168 = vmatpush1.msra.mxu0 0.0
    %169 = vmatprep.subr.mxu0 0.0
    %170 = vmatpush1.msra.mxu0 0.0
    %171 = vmatprep.subr.mxu0 0.0
    %172 = vmatpush1.msra.mxu0 0.0
    %173 = vmatprep.subr.mxu0 0.0
    %174 = vmatpush1.msra.mxu0 0.0
    %175 = vmatprep.subr.mxu0 0.0
    %176 = vmatpush1.msra.mxu0 0.0
    %177 = vmatprep.subr.mxu0 0.0
    %178 = vmatpush1.msra.mxu0 0.0
    %179 = vmatprep.subr.mxu0 0.0
    %180 = vmatpush1.msra.mxu0 0.0
    %181 = vmatprep.subr.mxu0 0.0
    %182 = vmatpush1.msra.mxu0 0.0
    %183 = vmatprep.subr.mxu0 0.0
    %184 = vmatpush1.msra.mxu0 0.0
    %185 = vmatprep.subr.mxu0 0.0
    %186 = vmatpush1.msra.mxu0 0.0
    %187 = vmatprep.subr.mxu0 0.0
    %188 = vmatpush1.msra.mxu0 0.0
    %189 = vmatprep.subr.mxu0 0.0
    %190 = vmatpush1.msra.mxu0 0.0
    %191 = vmatprep.subr.mxu0 0.0
    %192 = vmatpush1.msra.mxu0 0.0
    %193 = vmatprep.subr.mxu0 0.0
    %194 = vmatpush1.msra.mxu0 0.0
    %195 = vmatprep.subr.mxu0 0.0
    %196 = vmatpush1.msra.mxu0 0.0
    %197 = vmatprep.subr.mxu0 0.0
    %198 = vmatpush1.msra.mxu0 0.0
    %199 = vmatprep.subr.mxu0 0.0
    %200 = vmatpush1.msra.mxu0 0.0
    %201 = vmatprep.subr.mxu0 0.0
    %202 = vmatpush1.msra.mxu0 0.0
    %203 = vmatprep.subr.mxu0 0.0
    %204 = vmatpush1.msra.mxu0 0.0
    %205 = vmatprep.subr.mxu0 0.0
    %206 = vmatpush1.msra.mxu0 0.0
    %207 = vmatprep.subr.mxu0 0.0
    %208 = vmatpush1.msra.mxu0 0.0
    %209 = vmatprep.subr.mxu0 0.0
    %210 = vmatpush1.msra.mxu0 0.0
    %211 = vmatprep.subr.mxu0 0.0
    %212 = vmatpush1.msra.mxu0 0.0
    %213 = vmatprep.subr.mxu0 0.0
    %214 = vmatpush1.msra.mxu0 0.0
    %215 = vmatprep.mubr.f32.mxu0 0.0
    %216 = vmatmul.mubr.f32.gmra.mrb[0].mxu0 %v146
    %v217 = vpop.f32.mrb[0].mxu0
    %v218 = vadd.f32 0.0, %v217
    %v219 = vpop.f32.mrb[0].mxu0
    %220 = vmatprep.mubr.f32.mxu0 0.0
    %221 = vmatmul.mubr.f32.gmra.mrb[0].mxu0 %v149
    %v222 = vpop.f32.mrb[0].mxu0
    %v223 = vadd.f32 0.0, %v222
    %v224 = vpop.f32.mrb[0].mxu0
    %225 = vdwg.mxu0
    %v226 = vld [vmem:[%s5] sm:$0xff]
    %v227 = vld [vmem:[%s5 + $0x8] sm:$0xff]
    %v228 = vld [vmem:[%s5 + $0x10] sm:$0xff]
    %v229 = vld [vmem:[%s5 + $0x18] sm:$0xff]
    %v230 = vld [vmem:[%s5 + $0x20] sm:$0xff]
    %v231 = vld [vmem:[%s5 + $0x28] sm:$0xff]
    %v232 = vld [vmem:[%s5 + $0x30] sm:$0xff]
    %v233 = vld [vmem:[%s5 + $0x38] sm:$0xff]
    %v235 = vsel %vm144, %v226, 0
    %v238 = vsel %vm144, %v227, 0
    %v241 = vsel %vm144, %v228, 0
    %v244 = vsel %vm144, %v229, 0
    %v247 = vsel %vm144, %v230, 0
    %v250 = vsel %vm144, %v231, 0
    %v253 = vsel %vm144, %v232, 0
    %v256 = vsel %vm144, %v233, 0
    %258 = vmatprep.subr.mxu0 0.0
    %259 = vmatpush1.xpose.msra.mxu0 %v146
    %260 = vmatprep.subr.mxu0 0.0
    %261 = vmatpush1.xpose.msra.mxu0 %v149
    %262 = vmatprep.subr.mxu0 0.0
    %263 = vmatpush1.xpose.msra.mxu0 0.0
    %264 = vmatprep.subr.mxu0 0.0
    %265 = vmatpush1.xpose.msra.mxu0 0.0
    %266 = vmatprep.subr.mxu0 0.0
    %267 = vmatpush1.xpose.msra.mxu0 0.0
    %268 = vmatprep.subr.mxu0 0.0
    %269 = vmatpush1.xpose.msra.mxu0 0.0
    %270 = vmatprep.subr.mxu0 0.0
    %271 = vmatpush1.xpose.msra.mxu0 0.0
    %272 = vmatprep.subr.mxu0 0.0
    %273 = vmatpush1.xpose.msra.mxu0 0.0
    %274 = vmatprep.subr.mxu0 0.0
    %275 = vmatpush1.xpose.msra.mxu0 0.0
    %276 = vmatprep.subr.mxu0 0.0
    %277 = vmatpush1.xpose.msra.mxu0 0.0
    %278 = vmatprep.subr.mxu0 0.0
    %279 = vmatpush1.xpose.msra.mxu0 0.0
    %280 = vmatprep.subr.mxu0 0.0
    %281 = vmatpush1.xpose.msra.mxu0 0.0
    %282 = vmatprep.subr.mxu0 0.0
    %283 = vmatpush1.xpose.msra.mxu0 0.0
    %284 = vmatprep.subr.mxu0 0.0
    %285 = vmatpush1.xpose.msra.mxu0 0.0
    %286 = vmatprep.subr.mxu0 0.0
    %287 = vmatpush1.xpose.msra.mxu0 0.0
    %288 = vmatprep.subr.mxu0 0.0
    %289 = vmatpush1.xpose.msra.mxu0 0.0
    %290 = vmatprep.subr.mxu0 0.0
    %291 = vmatpush1.xpose.msra.mxu0 0.0
    %292 = vmatprep.subr.mxu0 0.0
    %293 = vmatpush1.xpose.msra.mxu0 0.0
    %294 = vmatprep.subr.mxu0 0.0
    %295 = vmatpush1.xpose.msra.mxu0 0.0
    %296 = vmatprep.subr.mxu0 0.0
    %297 = vmatpush1.xpose.msra.mxu0 0.0
    %298 = vmatprep.subr.mxu0 0.0
    %299 = vmatpush1.xpose.msra.mxu0 0.0
    %300 = vmatprep.subr.mxu0 0.0
    %301 = vmatpush1.xpose.msra.mxu0 0.0
    %302 = vmatprep.subr.mxu0 0.0
    %303 = vmatpush1.xpose.msra.mxu0 0.0
    %304 = vmatprep.subr.mxu0 0.0
    %305 = vmatpush1.xpose.msra.mxu0 0.0
    %306 = vmatprep.subr.mxu0 0.0
    %307 = vmatpush1.xpose.msra.mxu0 0.0
    %308 = vmatprep.subr.mxu0 0.0
    %309 = vmatpush1.xpose.msra.mxu0 0.0
    %310 = vmatprep.subr.mxu0 0.0
    %311 = vmatpush1.xpose.msra.mxu0 0.0
    %312 = vmatprep.subr.mxu0 0.0
    %313 = vmatpush1.xpose.msra.mxu0 0.0
    %314 = vmatprep.subr.mxu0 0.0
    %315 = vmatpush1.xpose.msra.mxu0 0.0
    %316 = vmatprep.subr.mxu0 0.0
    %317 = vmatpush1.xpose.msra.mxu0 0.0
    %318 = vmatprep.subr.mxu0 0.0
    %319 = vmatpush1.xpose.msra.mxu0 0.0
    %320 = vmatprep.subr.mxu0 0.0
    %321 = vmatpush1.xpose.msra.mxu0 0.0
    %322 = vmatprep.mubr.f32.mxu0 0.0
    %323 = vmatmul.mubr.f32.gmra.mrb[0].mxu0 %v235
    %v324 = vpop.f32.mrb[0].mxu0
    %v325 = vadd.f32 0.0, %v324
    %v326 = vpop.f32.mrb[0].mxu0
    %327 = vmatprep.mubr.f32.mxu0 0.0
    %328 = vmatmul.mubr.f32.gmra.mrb[0].mxu0 %v238
    %v329 = vpop.f32.mrb[0].mxu0
    %v330 = vadd.f32 0.0, %v329
    %v331 = vpop.f32.mrb[0].mxu0
    %332 = vmatprep.mubr.f32.mxu0 0.0
    %333 = vmatmul.mubr.f32.gmra.mrb[0].mxu0 %v241
    %v334 = vpop.f32.mrb[0].mxu0
    %v335 = vadd.f32 0.0, %v334
    %v336 = vpop.f32.mrb[0].mxu0
    %337 = vmatprep.mubr.f32.mxu0 0.0
    %338 = vmatmul.mubr.f32.gmra.mrb[0].mxu0 %v244
    %v339 = vpop.f32.mrb[0].mxu0
    %v340 = vadd.f32 0.0, %v339
    %v341 = vpop.f32.mrb[0].mxu0
    %342 = vmatprep.mubr.f32.mxu0 0.0
    %343 = vmatmul.mubr.f32.gmra.mrb[0].mxu0 %v247
    %v344 = vpop.f32.mrb[0].mxu0
    %v345 = vadd.f32 0.0, %v344
    %v346 = vpop.f32.mrb[0].mxu0
    %347 = vmatprep.mubr.f32.mxu0 0.0
    %348 = vmatmul.mubr.f32.gmra.mrb[0].mxu0 %v250
    %v349 = vpop.f32.mrb[0].mxu0
    %v350 = vadd.f32 0.0, %v349
    %v351 = vpop.f32.mrb[0].mxu0
    %352 = vmatprep.mubr.f32.mxu0 0.0
    %353 = vmatmul.mubr.f32.gmra.mrb[0].mxu0 %v253
    %v354 = vpop.f32.mrb[0].mxu0
    %v355 = vadd.f32 0.0, %v354
    %v356 = vpop.f32.mrb[0].mxu0
    %357 = vmatprep.mubr.f32.mxu0 0.0
    %358 = vmatmul.mubr.f32.gmra.mrb[0].mxu0 %v256
    %v359 = vpop.f32.mrb[0].mxu0
    %v360 = vadd.f32 0.0, %v359
    %v361 = vpop.f32.mrb[0].mxu0
    %362 = vdwg.mxu0
    %v363 = vlaneseq
    %v364 = vshrl.u32 %v363, 7
    %v365 = vadd.s32 %v364, 8
    %v366 = vadd.s32 %v364, 16
    %v367 = vadd.s32 %v364, 24
    %v368 = vadd.s32 %v364, 32
    %v369 = vadd.s32 %v364, 40
    %v370 = vadd.s32 %v364, 48
    %v371 = vadd.s32 %v364, 56
    %v372 = vshra.s32 %v34, 3
    %v373 = vshra.s32 %v364, 4
    %v374 = vshra.s32 %v365, 4
    %v375 = vshra.s32 %v366, 4
    %v376 = vshra.s32 %v367, 4
    %v377 = vshra.s32 %v368, 4
    %v378 = vshra.s32 %v369, 4
    %v379 = vshra.s32 %v370, 4
    %v380 = vshra.s32 %v371, 4
    %vm381 = vcmp.eq.s32.totalorder %v372, %v373
    %vm382 = vcmp.eq.s32.totalorder %v372, %v374
    %vm383 = vcmp.eq.s32.totalorder %v372, %v375
    %vm384 = vcmp.eq.s32.totalorder %v372, %v376
    %vm385 = vcmp.eq.s32.totalorder %v372, %v377
    %vm386 = vcmp.eq.s32.totalorder %v372, %v378
    %vm387 = vcmp.eq.s32.totalorder %v372, %v379
    %vm388 = vcmp.eq.s32.totalorder %v372, %v380
    %v389 = vsel %vm381, %v218, 0.0
    %v390 = vsel %vm382, %v223, 0.0
    %v391 = vsel %vm383, %v218, 0.0
    %v392 = vsel %vm384, %v223, 0.0
    %v393 = vsel %vm385, %v218, 0.0
    %v394 = vsel %vm386, %v223, 0.0
    %v395 = vsel %vm387, %v218, 0.0
    %v396 = vsel %vm388, %v223, 0.0
    %v398 = vsel %vm58, %v389, 0
    %v401 = vsel %vm58, %v390, 0
    %v404 = vsel %vm58, %v391, 0
    %v407 = vsel %vm58, %v392, 0
    %v410 = vsel %vm58, %v393, 0
    %v413 = vsel %vm58, %v394, 0
    %v416 = vsel %vm58, %v395, 0
    %v419 = vsel %vm58, %v396, 0
    %421 = vmatprep.subr.mxu0 0.0
    %422 = vmatpush1.msra.mxu0 %v325
    %423 = vmatprep.subr.mxu0 0.0
    %424 = vmatpush1.msra.mxu0 %v330
    %425 = vmatprep.subr.mxu0 0.0
    %426 = vmatpush1.msra.mxu0 %v335
    %427 = vmatprep.subr.mxu0 0.0
    %428 = vmatpush1.msra.mxu0 %v340
    %429 = vmatprep.subr.mxu0 0.0
    %430 = vmatpush1.msra.mxu0 %v345
    %431 = vmatprep.subr.mxu0 0.0
    %432 = vmatpush1.msra.mxu0 %v350
    %433 = vmatprep.subr.mxu0 0.0
    %434 = vmatpush1.msra.mxu0 %v355
    %435 = vmatprep.subr.mxu0 0.0
    %436 = vmatpush1.msra.mxu0 %v360
    %437 = vmatprep.subr.mxu0 0.0
    %438 = vmatpush1.msra.mxu0 0.0
    %439 = vmatprep.subr.mxu0 0.0
    %440 = vmatpush1.msra.mxu0 0.0
    %441 = vmatprep.subr.mxu0 0.0
    %442 = vmatpush1.msra.mxu0 0.0
    %443 = vmatprep.subr.mxu0 0.0
    %444 = vmatpush1.msra.mxu0 0.0
    %445 = vmatprep.subr.mxu0 0.0
    %446 = vmatpush1.msra.mxu0 0.0
    %447 = vmatprep.subr.mxu0 0.0
    %448 = vmatpush1.msra.mxu0 0.0
    %449 = vmatprep.subr.mxu0 0.0
    %450 = vmatpush1.msra.mxu0 0.0
    %451 = vmatprep.subr.mxu0 0.0
    %452 = vmatpush1.msra.mxu0 0.0
    %453 = vmatprep.subr.mxu0 0.0
    %454 = vmatpush1.msra.mxu0 0.0
    %455 = vmatprep.subr.mxu0 0.0
    %456 = vmatpush1.msra.mxu0 0.0
    %457 = vmatprep.subr.mxu0 0.0
    %458 = vmatpush1.msra.mxu0 0.0
    %459 = vmatprep.subr.mxu0 0.0
    %460 = vmatpush1.msra.mxu0 0.0
    %461 = vmatprep.subr.mxu0 0.0
    %462 = vmatpush1.msra.mxu0 0.0
    %463 = vmatprep.subr.mxu0 0.0
    %464 = vmatpush1.msra.mxu0 0.0
    %465 = vmatprep.subr.mxu0 0.0
    %466 = vmatpush1.msra.mxu0 0.0
    %467 = vmatprep.subr.mxu0 0.0
    %468 = vmatpush1.msra.mxu0 0.0
    %469 = vmatprep.subr.mxu0 0.0
    %470 = vmatpush1.msra.mxu0 0.0
    %471 = vmatprep.subr.mxu0 0.0
    %472 = vmatpush1.msra.mxu0 0.0
    %473 = vmatprep.subr.mxu0 0.0
    %474 = vmatpush1.msra.mxu0 0.0
    %475 = vmatprep.subr.mxu0 0.0
    %476 = vmatpush1.msra.mxu0 0.0
    %477 = vmatprep.subr.mxu0 0.0
    %478 = vmatpush1.msra.mxu0 0.0
    %479 = vmatprep.subr.mxu0 0.0
    %480 = vmatpush1.msra.mxu0 0.0
    %481 = vmatprep.subr.mxu0 0.0
    %482 = vmatpush1.msra.mxu0 0.0
    %483 = vmatprep.subr.mxu0 0.0
    %484 = vmatpush1.msra.mxu0 0.0
    %485 = vmatprep.mubr.f32.mxu0 0.0
    %486 = vmatmul.mubr.f32.gmra.mrb[0].mxu0 %v398
    %v487 = vpop.f32.mrb[0].mxu0
    %v488 = vadd.f32 0.0, %v487
    %v489 = vpop.f32.mrb[0].mxu0
    %490 = vmatprep.mubr.f32.mxu0 0.0
    %491 = vmatmul.mubr.f32.gmra.mrb[0].mxu0 %v401
    %v492 = vpop.f32.mrb[0].mxu0
    %v493 = vadd.f32 0.0, %v492
    %v494 = vpop.f32.mrb[0].mxu0
    %495 = vmatprep.mubr.f32.mxu0 0.0
    %496 = vmatmul.mubr.f32.gmra.mrb[0].mxu0 %v404
    %v497 = vpop.f32.mrb[0].mxu0
    %v498 = vadd.f32 0.0, %v497
    %v499 = vpop.f32.mrb[0].mxu0
    %500 = vmatprep.mubr.f32.mxu0 0.0
    %501 = vmatmul.mubr.f32.gmra.mrb[0].mxu0 %v407
    %v502 = vpop.f32.mrb[0].mxu0
    %v503 = vadd.f32 0.0, %v502
    %v504 = vpop.f32.mrb[0].mxu0
    %505 = vmatprep.mubr.f32.mxu0 0.0
    %506 = vmatmul.mubr.f32.gmra.mrb[0].mxu0 %v410
    %v507 = vpop.f32.mrb[0].mxu0
    %v508 = vadd.f32 0.0, %v507
    %v509 = vpop.f32.mrb[0].mxu0
    %510 = vmatprep.mubr.f32.mxu0 0.0
    %511 = vmatmul.mubr.f32.gmra.mrb[0].mxu0 %v413
    %v512 = vpop.f32.mrb[0].mxu0
    %v513 = vadd.f32 0.0, %v512
    %v514 = vpop.f32.mrb[0].mxu0
    %515 = vmatprep.mubr.f32.mxu0 0.0
    %516 = vmatmul.mubr.f32.gmra.mrb[0].mxu0 %v416
    %v517 = vpop.f32.mrb[0].mxu0
    %v518 = vadd.f32 0.0, %v517
    %v519 = vpop.f32.mrb[0].mxu0
    %520 = vmatprep.mubr.f32.mxu0 0.0
    %521 = vmatmul.mubr.f32.gmra.mrb[0].mxu0 %v419
    %v522 = vpop.f32.mrb[0].mxu0
    %v523 = vadd.f32 0.0, %v522
    %v524 = vpop.f32.mrb[0].mxu0
    %525 = vdwg.mxu0
    %v526 = vshra.s32 %v364, 3
    %v527 = vshra.s32 %v365, 3
    %v528 = vshra.s32 %v366, 3
    %v529 = vshra.s32 %v367, 3
    %v530 = vshra.s32 %v368, 3
    %v531 = vshra.s32 %v369, 3
    %v532 = vshra.s32 %v370, 3
    %v533 = vshra.s32 %v371, 3
    %v534 = vand.u32 %v526, 1
    %v535 = vand.u32 %v527, 1
    %v536 = vand.u32 %v528, 1
    %v537 = vand.u32 %v529, 1
    %v538 = vand.u32 %v530, 1
    %v539 = vand.u32 %v531, 1
    %v540 = vand.u32 %v532, 1
    %v541 = vand.u32 %v533, 1
    %vm542 = vcmp.eq.s32.totalorder %v534, %v372
    %vm543 = vcmp.eq.s32.totalorder %v535, %v372
    %vm544 = vcmp.eq.s32.totalorder %v536, %v372
    %vm545 = vcmp.eq.s32.totalorder %v537, %v372
    %vm546 = vcmp.eq.s32.totalorder %v538, %v372
    %vm547 = vcmp.eq.s32.totalorder %v539, %v372
    %vm548 = vcmp.eq.s32.totalorder %v540, %v372
    %vm549 = vcmp.eq.s32.totalorder %v541, %v372
    %v550 = vld [vmem:[%s0] sm:$0x1]
    %vm551 = vcmp.ne.s32.totalorder %v550, 0
    %v552 = vsel %vm551, 1, 0
    %v553 = vlaneseq
    %v554 = vshrl.u32 %v553, 7
    %v555 = vsub.s32 0, %v554
    %v556 = vrot.slane %v552, %v555
    %vm557 = vcmp.eq.s32.totalorder %v556, 1
    %vm558 = vmand %vm542, %vm557
    %vm559 = vmand %vm543, %vm557
    %vm560 = vmand %vm544, %vm557
    %vm561 = vmand %vm545, %vm557
    %vm562 = vmand %vm546, %vm557
    %vm563 = vmand %vm547, %vm557
    %vm564 = vmand %vm548, %vm557
    %vm565 = vmand %vm549, %vm557
    %v566 = vsel %vm558, %v488, -1.767767e+19
    %v567 = vsel %vm559, %v493, -1.767767e+19
    %v568 = vsel %vm560, %v498, -1.767767e+19
    %v569 = vsel %vm561, %v503, -1.767767e+19
    %v570 = vsel %vm562, %v508, -1.767767e+19
    %v571 = vsel %vm563, %v513, -1.767767e+19
    %v572 = vsel %vm564, %v518, -1.767767e+19
    %v573 = vsel %vm565, %v523, -1.767767e+19
    %vm574 = vcmask 130048
    %v575 = vsel %vm574, %v566, -inf
    %576 = vmax.xlane.f32.xlu0 %v575
    %v577 = vpop.xlane.xlu0 %576
    %v578 = vsel %vm574, %v567, -inf
    %579 = vmax.xlane.f32.xlu0 %v578
    %v580 = vpop.xlane.xlu0 %579
    %v581 = vsel %vm574, %v568, -inf
    %582 = vmax.xlane.f32.xlu0 %v581
    %v583 = vpop.xlane.xlu0 %582
    %v584 = vsel %vm574, %v569, -inf
    %585 = vmax.xlane.f32.xlu0 %v584
    %v586 = vpop.xlane.xlu0 %585
    %v587 = vsel %vm574, %v570, -inf
    %588 = vmax.xlane.f32.xlu0 %v587
    %v589 = vpop.xlane.xlu0 %588
    %v590 = vsel %vm574, %v571, -inf
    %591 = vmax.xlane.f32.xlu0 %v590
    %v592 = vpop.xlane.xlu0 %591
    %v593 = vsel %vm574, %v572, -inf
    %594 = vmax.xlane.f32.xlu0 %v593
    %v595 = vpop.xlane.xlu0 %594
    %v596 = vsel %vm574, %v573, -inf
    %597 = vmax.xlane.f32.xlu0 %v596
    %v598 = vpop.xlane.xlu0 %597
    %v599 = vsub.f32 %v566, %v577
    %v600 = vsub.f32 %v567, %v580
    %v601 = vsub.f32 %v568, %v583
    %v602 = vsub.f32 %v569, %v586
    %v603 = vsub.f32 %v570, %v589
    %v604 = vsub.f32 %v571, %v592
    %v605 = vsub.f32 %v572, %v595
    %v606 = vsub.f32 %v573, %v598
    %v607 = vmul.f32 %v599, 1.442695
    %v608 = vpow.pop %v607
    %v609 = vmul.f32 %v600, 1.442695
    %v610 = vpow.pop %v609
    %v611 = vmul.f32 %v601, 1.442695
    %v612 = vpow.pop %v611
    %v613 = vmul.f32 %v602, 1.442695
    %v614 = vpow.pop %v613
    %v615 = vmul.f32 %v603, 1.442695
    %v616 = vpow.pop %v615
    %v617 = vmul.f32 %v604, 1.442695
    %v618 = vpow.pop %v617
    %v619 = vmul.f32 %v605, 1.442695
    %v620 = vpow.pop %v619
    %v621 = vmul.f32 %v606, 1.442695
    %v622 = vpow.pop %v621
    %v623 = vsel %vm574, %v608, 0.0
    %624 = vadd.xlane.f32.xlu0 %v623
    %v625 = vpop.xlane.xlu0 %624
    %v626 = vsel %vm574, %v610, 0.0
    %627 = vadd.xlane.f32.xlu0 %v626
    %v628 = vpop.xlane.xlu0 %627
    %v629 = vsel %vm574, %v612, 0.0
    %630 = vadd.xlane.f32.xlu0 %v629
    %v631 = vpop.xlane.xlu0 %630
    %v632 = vsel %vm574, %v614, 0.0
    %633 = vadd.xlane.f32.xlu0 %v632
    %v634 = vpop.xlane.xlu0 %633
    %v635 = vsel %vm574, %v616, 0.0
    %636 = vadd.xlane.f32.xlu0 %v635
    %v637 = vpop.xlane.xlu0 %636
    %v638 = vsel %vm574, %v618, 0.0
    %639 = vadd.xlane.f32.xlu0 %v638
    %v640 = vpop.xlane.xlu0 %639
    %v641 = vsel %vm574, %v620, 0.0
    %642 = vadd.xlane.f32.xlu0 %v641
    %v643 = vpop.xlane.xlu0 %642
    %v644 = vsel %vm574, %v622, 0.0
    %645 = vadd.xlane.f32.xlu0 %v644
    %v646 = vpop.xlane.xlu0 %645
    %v647 = vrcp.pop %v625
    %v648 = vmul.f32 %v608, %v647
    %v649 = vrcp.pop %v628
    %v650 = vmul.f32 %v610, %v649
    %v651 = vrcp.pop %v631
    %v652 = vmul.f32 %v612, %v651
    %v653 = vrcp.pop %v634
    %v654 = vmul.f32 %v614, %v653
    %v655 = vrcp.pop %v637
    %v656 = vmul.f32 %v616, %v655
    %v657 = vrcp.pop %v640
    %v658 = vmul.f32 %v618, %v657
    %v659 = vrcp.pop %v643
    %v660 = vmul.f32 %v620, %v659
    %v661 = vrcp.pop %v646
    %v662 = vmul.f32 %v622, %v661
    %vm663 = vcmp.eq.s32.totalorder %v372, 4
    %v664 = vsel %vm663, %v218, 0.0
    %v665 = vsel %vm663, %v223, 0.0
    %vm666 = vcmp.eq.s32.totalorder %v372, 5
    %v667 = vsel %vm666, %v218, 0.0
    %v668 = vsel %vm666, %v223, 0.0
    %v670 = vsel %vm574, %v652, 0
    %v673 = vsel %vm574, %v654, 0
    %675 = vmatprep.subr.mxu0 0.0
    %676 = vmatpush1.msra.mxu0 %v667
    %677 = vmatprep.subr.mxu0 0.0
    %678 = vmatpush1.msra.mxu0 %v668
    %679 = vmatprep.subr.mxu0 0.0
    %680 = vmatpush1.msra.mxu0 0.0
    %681 = vmatprep.subr.mxu0 0.0
    %682 = vmatpush1.msra.mxu0 0.0
    %683 = vmatprep.subr.mxu0 0.0
    %684 = vmatpush1.msra.mxu0 0.0
    %685 = vmatprep.subr.mxu0 0.0
    %686 = vmatpush1.msra.mxu0 0.0
    %687 = vmatprep.subr.mxu0 0.0
    %688 = vmatpush1.msra.mxu0 0.0
    %689 = vmatprep.subr.mxu0 0.0
    %690 = vmatpush1.msra.mxu0 0.0
    %691 = vmatprep.subr.mxu0 0.0
    %692 = vmatpush1.msra.mxu0 0.0
    %693 = vmatprep.subr.mxu0 0.0
    %694 = vmatpush1.msra.mxu0 0.0
    %695 = vmatprep.subr.mxu0 0.0
    %696 = vmatpush1.msra.mxu0 0.0
    %697 = vmatprep.subr.mxu0 0.0
    %698 = vmatpush1.msra.mxu0 0.0
    %699 = vmatprep.subr.mxu0 0.0
    %700 = vmatpush1.msra.mxu0 0.0
    %701 = vmatprep.subr.mxu0 0.0
    %702 = vmatpush1.msra.mxu0 0.0
    %703 = vmatprep.subr.mxu0 0.0
    %704 = vmatpush1.msra.mxu0 0.0
    %705 = vmatprep.subr.mxu0 0.0
    %706 = vmatpush1.msra.mxu0 0.0
    %707 = vmatprep.subr.mxu0 0.0
    %708 = vmatpush1.msra.mxu0 0.0
    %709 = vmatprep.subr.mxu0 0.0
    %710 = vmatpush1.msra.mxu0 0.0
    %711 = vmatprep.subr.mxu0 0.0
    %712 = vmatpush1.msra.mxu0 0.0
    %713 = vmatprep.subr.mxu0 0.0
    %714 = vmatpush1.msra.mxu0 0.0
    %715 = vmatprep.subr.mxu0 0.0
    %716 = vmatpush1.msra.mxu0 0.0
    %717 = vmatprep.subr.mxu0 0.0
    %718 = vmatpush1.msra.mxu0 0.0
    %719 = vmatprep.subr.mxu0 0.0
    %720 = vmatpush1.msra.mxu0 0.0
    %721 = vmatprep.subr.mxu0 0.0
    %722 = vmatpush1.msra.mxu0 0.0
    %723 = vmatprep.subr.mxu0 0.0
    %724 = vmatpush1.msra.mxu0 0.0
    %725 = vmatprep.subr.mxu0 0.0
    %726 = vmatpush1.msra.mxu0 0.0
    %727 = vmatprep.subr.mxu0 0.0
    %728 = vmatpush1.msra.mxu0 0.0
    %729 = vmatprep.subr.mxu0 0.0
    %730 = vmatpush1.msra.mxu0 0.0
    %731 = vmatprep.subr.mxu0 0.0
    %732 = vmatpush1.msra.mxu0 0.0
    %733 = vmatprep.subr.mxu0 0.0
    %734 = vmatpush1.msra.mxu0 0.0
    %735 = vmatprep.subr.mxu0 0.0
    %736 = vmatpush1.msra.mxu0 0.0
    %737 = vmatprep.subr.mxu0 0.0
    %738 = vmatpush1.msra.mxu0 0.0
    %739 = vmatprep.mubr.f32.mxu0 0.0
    %740 = vmatmul.mubr.f32.gmra.mrb[0].mxu0 %v670
    %v741 = vpop.f32.mrb[0].mxu0
    %v742 = vadd.f32 0.0, %v741
    %v743 = vpop.f32.mrb[0].mxu0
    %744 = vmatprep.mubr.f32.mxu0 0.0
    %745 = vmatmul.mubr.f32.gmra.mrb[0].mxu0 %v673
    %v746 = vpop.f32.mrb[0].mxu0
    %v747 = vadd.f32 0.0, %v746
    %v748 = vpop.f32.mrb[0].mxu0
    %749 = vdwg.mxu0
    %v751 = vsel %vm574, %v648, 0
    %v754 = vsel %vm574, %v650, 0
    %756 = vmatprep.subr.mxu0 0.0
    %757 = vmatpush1.msra.mxu0 %v664
    %758 = vmatprep.subr.mxu0 0.0
    %759 = vmatpush1.msra.mxu0 %v665
    %760 = vmatprep.subr.mxu0 0.0
    %761 = vmatpush1.msra.mxu0 0.0
    %762 = vmatprep.subr.mxu0 0.0
    %763 = vmatpush1.msra.mxu0 0.0
    %764 = vmatprep.subr.mxu0 0.0
    %765 = vmatpush1.msra.mxu0 0.0
    %766 = vmatprep.subr.mxu0 0.0
    %767 = vmatpush1.msra.mxu0 0.0
    %768 = vmatprep.subr.mxu0 0.0
    %769 = vmatpush1.msra.mxu0 0.0
    %770 = vmatprep.subr.mxu0 0.0
    %771 = vmatpush1.msra.mxu0 0.0
    %772 = vmatprep.subr.mxu0 0.0
    %773 = vmatpush1.msra.mxu0 0.0
    %774 = vmatprep.subr.mxu0 0.0
    %775 = vmatpush1.msra.mxu0 0.0
    %776 = vmatprep.subr.mxu0 0.0
    %777 = vmatpush1.msra.mxu0 0.0
    %778 = vmatprep.subr.mxu0 0.0
    %779 = vmatpush1.msra.mxu0 0.0
    %780 = vmatprep.subr.mxu0 0.0
    %781 = vmatpush1.msra.mxu0 0.0
    %782 = vmatprep.subr.mxu0 0.0
    %783 = vmatpush1.msra.mxu0 0.0
    %784 = vmatprep.subr.mxu0 0.0
    %785 = vmatpush1.msra.mxu0 0.0
    %786 = vmatprep.subr.mxu0 0.0
    %787 = vmatpush1.msra.mxu0 0.0
    %788 = vmatprep.subr.mxu0 0.0
    %789 = vmatpush1.msra.mxu0 0.0
    %790 = vmatprep.subr.mxu0 0.0
    %791 = vmatpush1.msra.mxu0 0.0
    %792 = vmatprep.subr.mxu0 0.0
    %793 = vmatpush1.msra.mxu0 0.0
    %794 = vmatprep.subr.mxu0 0.0
    %795 = vmatpush1.msra.mxu0 0.0
    %796 = vmatprep.subr.mxu0 0.0
    %797 = vmatpush1.msra.mxu0 0.0
    %798 = vmatprep.subr.mxu0 0.0
    %799 = vmatpush1.msra.mxu0 0.0
    %800 = vmatprep.subr.mxu0 0.0
    %801 = vmatpush1.msra.mxu0 0.0
    %802 = vmatprep.subr.mxu0 0.0
    %803 = vmatpush1.msra.mxu0 0.0
    %804 = vmatprep.subr.mxu0 0.0
    %805 = vmatpush1.msra.mxu0 0.0
    %806 = vmatprep.subr.mxu0 0.0
    %807 = vmatpush1.msra.mxu0 0.0
    %808 = vmatprep.subr.mxu0 0.0
    %809 = vmatpush1.msra.mxu0 0.0
    %810 = vmatprep.subr.mxu0 0.0
    %811 = vmatpush1.msra.mxu0 0.0
    %812 = vmatprep.subr.mxu0 0.0
    %813 = vmatpush1.msra.mxu0 0.0
    %814 = vmatprep.subr.mxu0 0.0
    %815 = vmatpush1.msra.mxu0 0.0
    %816 = vmatprep.subr.mxu0 0.0
    %817 = vmatpush1.msra.mxu0 0.0
    %818 = vmatprep.subr.mxu0 0.0
    %819 = vmatpush1.msra.mxu0 0.0
    %820 = vmatprep.mubr.f32.mxu0 0.0
    %821 = vmatmul.mubr.f32.gmra.mrb[0].mxu0 %v751
    %v822 = vpop.f32.mrb[0].mxu0
    %v823 = vadd.f32 %v742, %v822
    %v824 = vpop.f32.mrb[0].mxu0
    %825 = vmatprep.mubr.f32.mxu0 0.0
    %826 = vmatmul.mubr.f32.gmra.mrb[0].mxu0 %v754
    %v827 = vpop.f32.mrb[0].mxu0
    %v828 = vadd.f32 %v747, %v827
    %v829 = vpop.f32.mrb[0].mxu0
    %830 = vdwg.mxu0
    %vm831 = vcmp.eq.s32.totalorder %v372, 6
    %v832 = vsel %vm831, %v218, 0.0
    %v833 = vsel %vm831, %v223, 0.0
    %v835 = vsel %vm574, %v656, 0
    %v838 = vsel %vm574, %v658, 0
    %840 = vmatprep.subr.mxu0 0.0
    %841 = vmatpush1.msra.mxu0 %v832
    %842 = vmatprep.subr.mxu0 0.0
    %843 = vmatpush1.msra.mxu0 %v833
    %844 = vmatprep.subr.mxu0 0.0
    %845 = vmatpush1.msra.mxu0 0.0
    %846 = vmatprep.subr.mxu0 0.0
    %847 = vmatpush1.msra.mxu0 0.0
    %848 = vmatprep.subr.mxu0 0.0
    %849 = vmatpush1.msra.mxu0 0.0
    %850 = vmatprep.subr.mxu0 0.0
    %851 = vmatpush1.msra.mxu0 0.0
    %852 = vmatprep.subr.mxu0 0.0
    %853 = vmatpush1.msra.mxu0 0.0
    %854 = vmatprep.subr.mxu0 0.0
    %855 = vmatpush1.msra.mxu0 0.0
    %856 = vmatprep.subr.mxu0 0.0
    %857 = vmatpush1.msra.mxu0 0.0
    %858 = vmatprep.subr.mxu0 0.0
    %859 = vmatpush1.msra.mxu0 0.0
    %860 = vmatprep.subr.mxu0 0.0
    %861 = vmatpush1.msra.mxu0 0.0
    %862 = vmatprep.subr.mxu0 0.0
    %863 = vmatpush1.msra.mxu0 0.0
    %864 = vmatprep.subr.mxu0 0.0
    %865 = vmatpush1.msra.mxu0 0.0
    %866 = vmatprep.subr.mxu0 0.0
    %867 = vmatpush1.msra.mxu0 0.0
    %868 = vmatprep.subr.mxu0 0.0
    %869 = vmatpush1.msra.mxu0 0.0
    %870 = vmatprep.subr.mxu0 0.0
    %871 = vmatpush1.msra.mxu0 0.0
    %872 = vmatprep.subr.mxu0 0.0
    %873 = vmatpush1.msra.mxu0 0.0
    %874 = vmatprep.subr.mxu0 0.0
    %875 = vmatpush1.msra.mxu0 0.0
    %876 = vmatprep.subr.mxu0 0.0
    %877 = vmatpush1.msra.mxu0 0.0
    %878 = vmatprep.subr.mxu0 0.0
    %879 = vmatpush1.msra.mxu0 0.0
    %880 = vmatprep.subr.mxu0 0.0
    %881 = vmatpush1.msra.mxu0 0.0
    %882 = vmatprep.subr.mxu0 0.0
    %883 = vmatpush1.msra.mxu0 0.0
    %884 = vmatprep.subr.mxu0 0.0
    %885 = vmatpush1.msra.mxu0 0.0
    %886 = vmatprep.subr.mxu0 0.0
    %887 = vmatpush1.msra.mxu0 0.0
    %888 = vmatprep.subr.mxu0 0.0
    %889 = vmatpush1.msra.mxu0 0.0
    %890 = vmatprep.subr.mxu0 0.0
    %891 = vmatpush1.msra.mxu0 0.0
    %892 = vmatprep.subr.mxu0 0.0
    %893 = vmatpush1.msra.mxu0 0.0
    %894 = vmatprep.subr.mxu0 0.0
    %895 = vmatpush1.msra.mxu0 0.0
    %896 = vmatprep.subr.mxu0 0.0
    %897 = vmatpush1.msra.mxu0 0.0
    %898 = vmatprep.subr.mxu0 0.0
    %899 = vmatpush1.msra.mxu0 0.0
    %900 = vmatprep.subr.mxu0 0.0
    %901 = vmatpush1.msra.mxu0 0.0
    %902 = vmatprep.subr.mxu0 0.0
    %903 = vmatpush1.msra.mxu0 0.0
    %904 = vmatprep.mubr.f32.mxu0 0.0
    %905 = vmatmul.mubr.f32.gmra.mrb[0].mxu0 %v835
    %v906 = vpop.f32.mrb[0].mxu0
    %v907 = vadd.f32 0.0, %v906
    %v908 = vpop.f32.mrb[0].mxu0
    %909 = vmatprep.mubr.f32.mxu0 0.0
    %910 = vmatmul.mubr.f32.gmra.mrb[0].mxu0 %v838
    %v911 = vpop.f32.mrb[0].mxu0
    %v912 = vadd.f32 0.0, %v911
    %v913 = vpop.f32.mrb[0].mxu0
    %914 = vdwg.mxu0
    %v915 = vadd.f32 %v823, %v907
    %v916 = vadd.f32 %v828, %v912
    %vm917 = vcmp.eq.s32.totalorder %v372, 7
    %v918 = vsel %vm917, %v218, 0.0
    %v919 = vsel %vm917, %v223, 0.0
    %v921 = vsel %vm574, %v660, 0
    %v924 = vsel %vm574, %v662, 0
    %926 = vmatprep.subr.mxu0 0.0
    %927 = vmatpush1.msra.mxu0 %v918
    %928 = vmatprep.subr.mxu0 0.0
    %929 = vmatpush1.msra.mxu0 %v919
    %930 = vmatprep.subr.mxu0 0.0
    %931 = vmatpush1.msra.mxu0 0.0
    %932 = vmatprep.subr.mxu0 0.0
    %933 = vmatpush1.msra.mxu0 0.0
    %934 = vmatprep.subr.mxu0 0.0
    %935 = vmatpush1.msra.mxu0 0.0
    %936 = vmatprep.subr.mxu0 0.0
    %937 = vmatpush1.msra.mxu0 0.0
    %938 = vmatprep.subr.mxu0 0.0
    %939 = vmatpush1.msra.mxu0 0.0
    %940 = vmatprep.subr.mxu0 0.0
    %941 = vmatpush1.msra.mxu0 0.0
    %942 = vmatprep.subr.mxu0 0.0
    %943 = vmatpush1.msra.mxu0 0.0
    %944 = vmatprep.subr.mxu0 0.0
    %945 = vmatpush1.msra.mxu0 0.0
    %946 = vmatprep.subr.mxu0 0.0
    %947 = vmatpush1.msra.mxu0 0.0
    %948 = vmatprep.subr.mxu0 0.0
    %949 = vmatpush1.msra.mxu0 0.0
    %950 = vmatprep.subr.mxu0 0.0
    %951 = vmatpush1.msra.mxu0 0.0
    %952 = vmatprep.subr.mxu0 0.0
    %953 = vmatpush1.msra.mxu0 0.0
    %954 = vmatprep.subr.mxu0 0.0
    %955 = vmatpush1.msra.mxu0 0.0
    %956 = vmatprep.subr.mxu0 0.0
    %957 = vmatpush1.msra.mxu0 0.0
    %958 = vmatprep.subr.mxu0 0.0
    %959 = vmatpush1.msra.mxu0 0.0
    %960 = vmatprep.subr.mxu0 0.0
    %961 = vmatpush1.msra.mxu0 0.0
    %962 = vmatprep.subr.mxu0 0.0
    %963 = vmatpush1.msra.mxu0 0.0
    %964 = vmatprep.subr.mxu0 0.0
    %965 = vmatpush1.msra.mxu0 0.0
    %966 = vmatprep.subr.mxu0 0.0
    %967 = vmatpush1.msra.mxu0 0.0
    %968 = vmatprep.subr.mxu0 0.0
    %969 = vmatpush1.msra.mxu0 0.0
    %970 = vmatprep.subr.mxu0 0.0
    %971 = vmatpush1.msra.mxu0 0.0
    %972 = vmatprep.subr.mxu0 0.0
    %973 = vmatpush1.msra.mxu0 0.0
    %974 = vmatprep.subr.mxu0 0.0
    %975 = vmatpush1.msra.mxu0 0.0
    %976 = vmatprep.subr.mxu0 0.0
    %977 = vmatpush1.msra.mxu0 0.0
    %978 = vmatprep.subr.mxu0 0.0
    %979 = vmatpush1.msra.mxu0 0.0
    %980 = vmatprep.subr.mxu0 0.0
    %981 = vmatpush1.msra.mxu0 0.0
    %982 = vmatprep.subr.mxu0 0.0
    %983 = vmatpush1.msra.mxu0 0.0
    %984 = vmatprep.subr.mxu0 0.0
    %985 = vmatpush1.msra.mxu0 0.0
    %986 = vmatprep.subr.mxu0 0.0
    %987 = vmatpush1.msra.mxu0 0.0
    %988 = vmatprep.subr.mxu0 0.0
    %989 = vmatpush1.msra.mxu0 0.0
    %990 = vmatprep.mubr.f32.mxu0 0.0
    %991 = vmatmul.mubr.f32.gmra.mrb[0].mxu0 %v921
    %v992 = vpop.f32.mrb[0].mxu0
    %v993 = vadd.f32 0.0, %v992
    %v994 = vpop.f32.mrb[0].mxu0
    %995 = vmatprep.mubr.f32.mxu0 0.0
    %996 = vmatmul.mubr.f32.gmra.mrb[0].mxu0 %v924
    %v997 = vpop.f32.mrb[0].mxu0
    %v998 = vadd.f32 0.0, %v997
    %v999 = vpop.f32.mrb[0].mxu0
    %1000 = vdwg.mxu0
    %v1001 = vadd.f32 %v915, %v993
    %v1002 = vadd.f32 %v916, %v998
    %v1003 = vld [vmem:[%s8] sm:$0x1]
    %v1004 = vlaneseq
    %v1005 = vshrl.u32 %v1004, 7
    %v1006 = vsub.s32 0, %v1005
    %v1007 = vrot.slane %v1003, %v1006
    %v1009 = vsel %vm58, %v1001, 0
    %v1012 = vsel %vm58, %v1002, 0
    %1014 = vmatprep.subr.mxu0 0.0
    %1015 = vmatpush1.msra.mxu0 %v226
    %1016 = vmatprep.subr.mxu0 0.0
    %1017 = vmatpush1.msra.mxu0 %v227
    %1018 = vmatprep.subr.mxu0 0.0
    %1019 = vmatpush1.msra.mxu0 %v228
    %1020 = vmatprep.subr.mxu0 0.0
    %1021 = vmatpush1.msra.mxu0 %v229
    %1022 = vmatprep.subr.mxu0 0.0
    %1023 = vmatpush1.msra.mxu0 %v230
    %1024 = vmatprep.subr.mxu0 0.0
    %1025 = vmatpush1.msra.mxu0 %v231
    %1026 = vmatprep.subr.mxu0 0.0
    %1027 = vmatpush1.msra.mxu0 %v232
    %1028 = vmatprep.subr.mxu0 0.0
    %1029 = vmatpush1.msra.mxu0 %v233
    %1030 = vmatprep.subr.mxu0 0.0
    %1031 = vmatpush1.msra.mxu0 0.0
    %1032 = vmatprep.subr.mxu0 0.0
    %1033 = vmatpush1.msra.mxu0 0.0
    %1034 = vmatprep.subr.mxu0 0.0
    %1035 = vmatpush1.msra.mxu0 0.0
    %1036 = vmatprep.subr.mxu0 0.0
    %1037 = vmatpush1.msra.mxu0 0.0
    %1038 = vmatprep.subr.mxu0 0.0
    %1039 = vmatpush1.msra.mxu0 0.0
    %1040 = vmatprep.subr.mxu0 0.0
    %1041 = vmatpush1.msra.mxu0 0.0
    %1042 = vmatprep.subr.mxu0 0.0
    %1043 = vmatpush1.msra.mxu0 0.0
    %1044 = vmatprep.subr.mxu0 0.0
    %1045 = vmatpush1.msra.mxu0 0.0
    %1046 = vmatprep.subr.mxu0 0.0
    %1047 = vmatpush1.msra.mxu0 0.0
    %1048 = vmatprep.subr.mxu0 0.0
    %1049 = vmatpush1.msra.mxu0 0.0
    %1050 = vmatprep.subr.mxu0 0.0
    %1051 = vmatpush1.msra.mxu0 0.0
    %1052 = vmatprep.subr.mxu0 0.0
    %1053 = vmatpush1.msra.mxu0 0.0
    %1054 = vmatprep.subr.mxu0 0.0
    %1055 = vmatpush1.msra.mxu0 0.0
    %1056 = vmatprep.subr.mxu0 0.0
    %1057 = vmatpush1.msra.mxu0 0.0
    %1058 = vmatprep.subr.mxu0 0.0
    %1059 = vmatpush1.msra.mxu0 0.0
    %1060 = vmatprep.subr.mxu0 0.0
    %1061 = vmatpush1.msra.mxu0 0.0
    %1062 = vmatprep.subr.mxu0 0.0
    %1063 = vmatpush1.msra.mxu0 0.0
    %1064 = vmatprep.subr.mxu0 0.0
    %1065 = vmatpush1.msra.mxu0 0.0
    %1066 = vmatprep.subr.mxu0 0.0
    %1067 = vmatpush1.msra.mxu0 0.0
    %1068 = vmatprep.subr.mxu0 0.0
    %1069 = vmatpush1.msra.mxu0 0.0
    %1070 = vmatprep.subr.mxu0 0.0
    %1071 = vmatpush1.msra.mxu0 0.0
    %1072 = vmatprep.subr.mxu0 0.0
    %1073 = vmatpush1.msra.mxu0 0.0
    %1074 = vmatprep.subr.mxu0 0.0
    %1075 = vmatpush1.msra.mxu0 0.0
    %1076 = vmatprep.subr.mxu0 0.0
    %1077 = vmatpush1.msra.mxu0 0.0
    %1078 = vmatprep.mubr.f32.mxu0 0.0
    %1079 = vmatmul.mubr.f32.gmra.mrb[0].mxu0 %v1009
    %v1080 = vpop.f32.mrb[0].mxu0
    %v1081 = vadd.f32 %v1007, %v1080
    %v1082 = vpop.f32.mrb[0].mxu0
    %1083 = vmatprep.mubr.f32.mxu0 0.0
    %1084 = vmatmul.mubr.f32.gmra.mrb[0].mxu0 %v1012
    %v1085 = vpop.f32.mrb[0].mxu0
    %v1086 = vadd.f32 %v1007, %v1085
    %v1087 = vpop.f32.mrb[0].mxu0
    %1088 = vdwg.mxu0
    %v1089 = vadd.f32 %v1081, %v132
    %v1090 = vadd.f32 %v1086, %v137
    %v1091 = vld [vmem:[%s8 + $0x1] sm:$0x1]
    %v1092 = vld [vmem:[%s8 + $0x2] sm:$0x1]
    %v1093 = vsel %vm144, %v1089, 0.0
    %1094 = vadd.xlane.f32.xlu0 %v1093
    %v1095 = vpop.xlane.xlu0 %1094
    %v1096 = vsel %vm144, %v1090, 0.0
    %1097 = vadd.xlane.f32.xlu0 %v1096
    %v1098 = vpop.xlane.xlu0 %1097
    %v1099 = vrcp.pop 32.0
    %v1100 = vmul.f32 %v1095, %v1099
    %v1101 = vmul.f32 %v1098, %v1099
    %v1102 = vsub.f32 %v1089, %v1100
    %v1103 = vsub.f32 %v1090, %v1101
    %v1104 = vmul.f32 %v1102, %v1102
    %v1105 = vmul.f32 %v1103, %v1103
    %v1106 = vsel %vm144, %v1104, 0.0
    %1107 = vadd.xlane.f32.xlu0 %v1106
    %v1108 = vpop.xlane.xlu0 %1107
    %v1109 = vsel %vm144, %v1105, 0.0
    %1110 = vadd.xlane.f32.xlu0 %v1109
    %v1111 = vpop.xlane.xlu0 %1110
    %v1112 = vmul.f32 %v1108, %v1099
    %v1113 = vmul.f32 %v1111, %v1099
    %v1114 = vadd.f32 %v1112, 1e-05
    %v1115 = vadd.f32 %v1113, 1e-05
    %v1116 = vrsqrt.pop %v1114
    %v1117 = vrsqrt.pop %v1115
    %v1118 = vmul.f32 %v1102, %v1116
    %v1119 = vmul.f32 %v1103, %v1117
    %v1120 = vlaneseq
    %v1121 = vshrl.u32 %v1120, 7
    %v1122 = vsub.s32 0, %v1121
    %v1123 = vrot.slane %v1091, %v1122
    %v1124 = vmul.f32 %v1118, %v1123
    %v1125 = vmul.f32 %v1119, %v1123
    %v1126 = vlaneseq
    %v1127 = vshrl.u32 %v1126, 7
    %v1128 = vsub.s32 0, %v1127
    %v1129 = vrot.slane %v1092, %v1128
    %v1130 = vadd.f32 %v1124, %v1129
    %v1131 = vadd.f32 %v1125, %v1129
    %v1132 = vld [vmem:[%s6] sm:$0xff]
    %v1133 = vld [vmem:[%s6 + $0x8] sm:$0xff]
    %v1134 = vld [vmem:[%s6 + $0x10] sm:$0xff]
    %v1135 = vld [vmem:[%s6 + $0x18] sm:$0xff]
    %v1136 = vld [vmem:[%s8 + $0x6] sm:$0x1]
    %v1137 = vlaneseq
    %v1138 = vshrl.u32 %v1137, 7
    %v1139 = vsub.s32 0, %v1138
    %v1140 = vrot.slane %v1136, %v1139
    %v1142 = vsel %vm144, %v1130, 0
    %v1145 = vsel %vm144, %v1131, 0
    %1147 = vmatprep.subr.mxu0 0.0
    %1148 = vmatpush1.msra.mxu0 %v1132
    %1149 = vmatprep.subr.mxu0 0.0
    %1150 = vmatpush1.msra.mxu0 %v1133
    %1151 = vmatprep.subr.mxu0 0.0
    %1152 = vmatpush1.msra.mxu0 %v1134
    %1153 = vmatprep.subr.mxu0 0.0
    %1154 = vmatpush1.msra.mxu0 %v1135
    %1155 = vmatprep.subr.mxu0 0.0
    %1156 = vmatpush1.msra.mxu0 0.0
    %1157 = vmatprep.subr.mxu0 0.0
    %1158 = vmatpush1.msra.mxu0 0.0
    %1159 = vmatprep.subr.mxu0 0.0
    %1160 = vmatpush1.msra.mxu0 0.0
    %1161 = vmatprep.subr.mxu0 0.0
    %1162 = vmatpush1.msra.mxu0 0.0
    %1163 = vmatprep.subr.mxu0 0.0
    %1164 = vmatpush1.msra.mxu0 0.0
    %1165 = vmatprep.subr.mxu0 0.0
    %1166 = vmatpush1.msra.mxu0 0.0
    %1167 = vmatprep.subr.mxu0 0.0
    %1168 = vmatpush1.msra.mxu0 0.0
    %1169 = vmatprep.subr.mxu0 0.0
    %1170 = vmatpush1.msra.mxu0 0.0
    %1171 = vmatprep.subr.mxu0 0.0
    %1172 = vmatpush1.msra.mxu0 0.0
    %1173 = vmatprep.subr.mxu0 0.0
    %1174 = vmatpush1.msra.mxu0 0.0
    %1175 = vmatprep.subr.mxu0 0.0
    %1176 = vmatpush1.msra.mxu0 0.0
    %1177 = vmatprep.subr.mxu0 0.0
    %1178 = vmatpush1.msra.mxu0 0.0
    %1179 = vmatprep.subr.mxu0 0.0
    %1180 = vmatpush1.msra.mxu0 0.0
    %1181 = vmatprep.subr.mxu0 0.0
    %1182 = vmatpush1.msra.mxu0 0.0
    %1183 = vmatprep.subr.mxu0 0.0
    %1184 = vmatpush1.msra.mxu0 0.0
    %1185 = vmatprep.subr.mxu0 0.0
    %1186 = vmatpush1.msra.mxu0 0.0
    %1187 = vmatprep.subr.mxu0 0.0
    %1188 = vmatpush1.msra.mxu0 0.0
    %1189 = vmatprep.subr.mxu0 0.0
    %1190 = vmatpush1.msra.mxu0 0.0
    %1191 = vmatprep.subr.mxu0 0.0
    %1192 = vmatpush1.msra.mxu0 0.0
    %1193 = vmatprep.subr.mxu0 0.0
    %1194 = vmatpush1.msra.mxu0 0.0
    %1195 = vmatprep.subr.mxu0 0.0
    %1196 = vmatpush1.msra.mxu0 0.0
    %1197 = vmatprep.subr.mxu0 0.0
    %1198 = vmatpush1.msra.mxu0 0.0
    %1199 = vmatprep.subr.mxu0 0.0
    %1200 = vmatpush1.msra.mxu0 0.0
    %1201 = vmatprep.subr.mxu0 0.0
    %1202 = vmatpush1.msra.mxu0 0.0
    %1203 = vmatprep.subr.mxu0 0.0
    %1204 = vmatpush1.msra.mxu0 0.0
    %1205 = vmatprep.subr.mxu0 0.0
    %1206 = vmatpush1.msra.mxu0 0.0
    %1207 = vmatprep.subr.mxu0 0.0
    %1208 = vmatpush1.msra.mxu0 0.0
    %1209 = vmatprep.subr.mxu0 0.0
    %1210 = vmatpush1.msra.mxu0 0.0
    %1211 = vmatprep.mubr.f32.mxu0 0.0
    %1212 = vmatmul.mubr.f32.gmra.mrb[0].mxu0 %v1142
    %v1213 = vpop.f32.mrb[0].mxu0
    %v1214 = vadd.f32 %v1140, %v1213
    %v1215 = vpop.f32.mrb[0].mxu0
    %1216 = vmatprep.mubr.f32.mxu0 0.0
    %1217 = vmatmul.mubr.f32.gmra.mrb[0].mxu0 %v1145
    %v1218 = vpop.f32.mrb[0].mxu0
    %v1219 = vadd.f32 %v1140, %v1218
    %v1220 = vpop.f32.mrb[0].mxu0
    %1221 = vdwg.mxu0
    %v1222 = vmax.f32 %v1214, 0.0
    %v1223 = vmax.f32 %v1219, 0.0
    %v1224 = vld [vmem:[%s6 + $0x20] sm:$0xff]
    %v1225 = vld [vmem:[%s6 + $0x28] sm:$0xff]
    %v1226 = vld [vmem:[%s6 + $0x30] sm:$0xff]
    %v1227 = vld [vmem:[%s6 + $0x38] sm:$0xff]
    %v1228 = vld [vmem:[%s8 + $0x3] sm:$0x1]
    %v1229 = vlaneseq
    %v1230 = vshrl.u32 %v1229, 7
    %v1231 = vsub.s32 0, %v1230
    %v1232 = vrot.slane %v1228, %v1231
    %1233 = vmatprep.subr.mxu0 0.0
    %1234 = vmatpush1.xpose.msra.mxu0 %v1224
    %1235 = vmatprep.subr.mxu0 0.0
    %1236 = vmatpush1.xpose.msra.mxu0 %v1225
    %1237 = vmatprep.subr.mxu0 0.0
    %1238 = vmatpush1.xpose.msra.mxu0 %v1226
    %1239 = vmatprep.subr.mxu0 0.0
    %1240 = vmatpush1.xpose.msra.mxu0 %v1227
    %1241 = vmatprep.subr.mxu0 0.0
    %1242 = vmatpush1.xpose.msra.mxu0 0.0
    %1243 = vmatprep.subr.mxu0 0.0
    %1244 = vmatpush1.xpose.msra.mxu0 0.0
    %1245 = vmatprep.subr.mxu0 0.0
    %1246 = vmatpush1.xpose.msra.mxu0 0.0
    %1247 = vmatprep.subr.mxu0 0.0
    %1248 = vmatpush1.xpose.msra.mxu0 0.0
    %1249 = vmatprep.subr.mxu0 0.0
    %1250 = vmatpush1.xpose.msra.mxu0 0.0
    %1251 = vmatprep.subr.mxu0 0.0
    %1252 = vmatpush1.xpose.msra.mxu0 0.0
    %1253 = vmatprep.subr.mxu0 0.0
    %1254 = vmatpush1.xpose.msra.mxu0 0.0
    %1255 = vmatprep.subr.mxu0 0.0
    %1256 = vmatpush1.xpose.msra.mxu0 0.0
    %1257 = vmatprep.subr.mxu0 0.0
    %1258 = vmatpush1.xpose.msra.mxu0 0.0
    %1259 = vmatprep.subr.mxu0 0.0
    %1260 = vmatpush1.xpose.msra.mxu0 0.0
    %1261 = vmatprep.subr.mxu0 0.0
    %1262 = vmatpush1.xpose.msra.mxu0 0.0
    %1263 = vmatprep.subr.mxu0 0.0
    %1264 = vmatpush1.xpose.msra.mxu0 0.0
    %1265 = vmatprep.subr.mxu0 0.0
    %1266 = vmatpush1.xpose.msra.mxu0 0.0
    %1267 = vmatprep.subr.mxu0 0.0
    %1268 = vmatpush1.xpose.msra.mxu0 0.0
    %1269 = vmatprep.subr.mxu0 0.0
    %1270 = vmatpush1.xpose.msra.mxu0 0.0
    %1271 = vmatprep.subr.mxu0 0.0
    %1272 = vmatpush1.xpose.msra.mxu0 0.0
    %1273 = vmatprep.subr.mxu0 0.0
    %1274 = vmatpush1.xpose.msra.mxu0 0.0
    %1275 = vmatprep.subr.mxu0 0.0
    %1276 = vmatpush1.xpose.msra.mxu0 0.0
    %1277 = vmatprep.subr.mxu0 0.0
    %1278 = vmatpush1.xpose.msra.mxu0 0.0
    %1279 = vmatprep.subr.mxu0 0.0
    %1280 = vmatpush1.xpose.msra.mxu0 0.0
    %1281 = vmatprep.subr.mxu0 0.0
    %1282 = vmatpush1.xpose.msra.mxu0 0.0
    %1283 = vmatprep.subr.mxu0 0.0
    %1284 = vmatpush1.xpose.msra.mxu0 0.0
    %1285 = vmatprep.subr.mxu0 0.0
    %1286 = vmatpush1.xpose.msra.mxu0 0.0
    %1287 = vmatprep.subr.mxu0 0.0
    %1288 = vmatpush1.xpose.msra.mxu0 0.0
    %1289 = vmatprep.subr.mxu0 0.0
    %1290 = vmatpush1.xpose.msra.mxu0 0.0
    %1291 = vmatprep.subr.mxu0 0.0
    %1292 = vmatpush1.xpose.msra.mxu0 0.0
    %1293 = vmatprep.subr.mxu0 0.0
    %1294 = vmatpush1.xpose.msra.mxu0 0.0
    %1295 = vmatprep.subr.mxu0 0.0
    %1296 = vmatpush1.xpose.msra.mxu0 0.0
    %1297 = vmatprep.mubr.f32.mxu0 0.0
    %1298 = vmatmul.mubr.f32.gmra.mrb[0].mxu0 %v1222
    %v1299 = vpop.f32.mrb[0].mxu0
    %v1300 = vadd.f32 %v1232, %v1299
    %v1301 = vpop.f32.mrb[0].mxu0
    %1302 = vmatprep.mubr.f32.mxu0 0.0
    %1303 = vmatmul.mubr.f32.gmra.mrb[0].mxu0 %v1223
    %v1304 = vpop.f32.mrb[0].mxu0
    %v1305 = vadd.f32 %v1232, %v1304
    %v1306 = vpop.f32.mrb[0].mxu0
    %1307 = vdwg.mxu0
    %v1308 = vadd.f32 %v1300, %v1130
    %v1309 = vadd.f32 %v1305, %v1131
    %v1310 = vld [vmem:[%s8 + $0x4] sm:$0x1]
    %v1311 = vld [vmem:[%s8 + $0x5] sm:$0x1]
    %v1312 = vsel %vm144, %v1308, 0.0
    %1313 = vadd.xlane.f32.xlu0 %v1312
    %v1314 = vpop.xlane.xlu0 %1313
    %v1315 = vsel %vm144, %v1309, 0.0
    %1316 = vadd.xlane.f32.xlu0 %v1315
    %v1317 = vpop.xlane.xlu0 %1316
    %v1318 = vmul.f32 %v1314, %v1099
    %v1319 = vmul.f32 %v1317, %v1099
    %v1320 = vsub.f32 %v1308, %v1318
    %v1321 = vsub.f32 %v1309, %v1319
    %v1322 = vmul.f32 %v1320, %v1320
    %v1323 = vmul.f32 %v1321, %v1321
    %v1324 = vsel %vm144, %v1322, 0.0
    %1325 = vadd.xlane.f32.xlu0 %v1324
    %v1326 = vpop.xlane.xlu0 %1325
    %v1327 = vsel %vm144, %v1323, 0.0
    %1328 = vadd.xlane.f32.xlu0 %v1327
    %v1329 = vpop.xlane.xlu0 %1328
    %v1330 = vmul.f32 %v1326, %v1099
    %v1331 = vmul.f32 %v1329, %v1099
    %v1332 = vadd.f32 %v1330, 1e-05
    %v1333 = vadd.f32 %v1331, 1e-05
    %v1334 = vrsqrt.pop %v1332
    %v1335 = vrsqrt.pop %v1333
    %v1336 = vmul.f32 %v1320, %v1334
    %v1337 = vmul.f32 %v1321, %v1335
    %v1338 = vlaneseq
    %v1339 = vshrl.u32 %v1338, 7
    %v1340 = vsub.s32 0, %v1339
    %v1341 = vrot.slane %v1310, %v1340
    %v1342 = vmul.f32 %v1336, %v1341
    %v1343 = vmul.f32 %v1337, %v1341
    %v1344 = vlaneseq
    %v1345 = vshrl.u32 %v1344, 7
    %v1346 = vsub.s32 0, %v1345
    %v1347 = vrot.slane %v1311, %v1346
    %v1348 = vadd.f32 %v1342, %v1347
    %v1349 = vadd.f32 %v1343, %v1347
    %v1350 = vld [vmem:[%s7] sm:$0xff]
    %v1351 = vld [vmem:[%s7 + $0x8] sm:$0xff]
    %v1352 = vld [vmem:[%s7 + $0x10] sm:$0xff]
    %v1353 = vld [vmem:[%s7 + $0x18] sm:$0xff]
    %v1355 = vsel %vm144, %v1348, 0
    %v1358 = vsel %vm144, %v1349, 0
    %1360 = vmatprep.subr.mxu0 0.0
    %1361 = vmatpush1.msra.mxu0 %v1350
    %1362 = vmatprep.subr.mxu0 0.0
    %1363 = vmatpush1.msra.mxu0 %v1351
    %1364 = vmatprep.subr.mxu0 0.0
    %1365 = vmatpush1.msra.mxu0 %v1352
    %1366 = vmatprep.subr.mxu0 0.0
    %1367 = vmatpush1.msra.mxu0 %v1353
    %1368 = vmatprep.subr.mxu0 0.0
    %1369 = vmatpush1.msra.mxu0 0.0
    %1370 = vmatprep.subr.mxu0 0.0
    %1371 = vmatpush1.msra.mxu0 0.0
    %1372 = vmatprep.subr.mxu0 0.0
    %1373 = vmatpush1.msra.mxu0 0.0
    %1374 = vmatprep.subr.mxu0 0.0
    %1375 = vmatpush1.msra.mxu0 0.0
    %1376 = vmatprep.subr.mxu0 0.0
    %1377 = vmatpush1.msra.mxu0 0.0
    %1378 = vmatprep.subr.mxu0 0.0
    %1379 = vmatpush1.msra.mxu0 0.0
    %1380 = vmatprep.subr.mxu0 0.0
    %1381 = vmatpush1.msra.mxu0 0.0
    %1382 = vmatprep.subr.mxu0 0.0
    %1383 = vmatpush1.msra.mxu0 0.0
    %1384 = vmatprep.subr.mxu0 0.0
    %1385 = vmatpush1.msra.mxu0 0.0
    %1386 = vmatprep.subr.mxu0 0.0
    %1387 = vmatpush1.msra.mxu0 0.0
    %1388 = vmatprep.subr.mxu0 0.0
    %1389 = vmatpush1.msra.mxu0 0.0
    %1390 = vmatprep.subr.mxu0 0.0
    %1391 = vmatpush1.msra.mxu0 0.0
    %1392 = vmatprep.subr.mxu0 0.0
    %1393 = vmatpush1.msra.mxu0 0.0
    %1394 = vmatprep.subr.mxu0 0.0
    %1395 = vmatpush1.msra.mxu0 0.0
    %1396 = vmatprep.subr.mxu0 0.0
    %1397 = vmatpush1.msra.mxu0 0.0
    %1398 = vmatprep.subr.mxu0 0.0
    %1399 = vmatpush1.msra.mxu0 0.0
    %1400 = vmatprep.subr.mxu0 0.0
    %1401 = vmatpush1.msra.mxu0 0.0
    %1402 = vmatprep.subr.mxu0 0.0
    %1403 = vmatpush1.msra.mxu0 0.0
    %1404 = vmatprep.subr.mxu0 0.0
    %1405 = vmatpush1.msra.mxu0 0.0
    %1406 = vmatprep.subr.mxu0 0.0
    %1407 = vmatpush1.msra.mxu0 0.0
    %1408 = vmatprep.subr.mxu0 0.0
    %1409 = vmatpush1.msra.mxu0 0.0
    %1410 = vmatprep.subr.mxu0 0.0
    %1411 = vmatpush1.msra.mxu0 0.0
    %1412 = vmatprep.subr.mxu0 0.0
    %1413 = vmatpush1.msra.mxu0 0.0
    %1414 = vmatprep.subr.mxu0 0.0
    %1415 = vmatpush1.msra.mxu0 0.0
    %1416 = vmatprep.subr.mxu0 0.0
    %1417 = vmatpush1.msra.mxu0 0.0
    %1418 = vmatprep.subr.mxu0 0.0
    %1419 = vmatpush1.msra.mxu0 0.0
    %1420 = vmatprep.subr.mxu0 0.0
    %1421 = vmatpush1.msra.mxu0 0.0
    %1422 = vmatprep.subr.mxu0 0.0
    %1423 = vmatpush1.msra.mxu0 0.0
    %1424 = vmatprep.mubr.f32.mxu0 0.0
    %1425 = vmatmul.mubr.f32.gmra.mrb[0].mxu0 %v1355
    %v1426 = vpop.f32.mrb[0].mxu0
    %v1427 = vadd.f32 0.0, %v1426
    %v1428 = vpop.f32.mrb[0].mxu0
    %1429 = vmatprep.mubr.f32.mxu0 0.0
    %1430 = vmatmul.mubr.f32.gmra.mrb[0].mxu0 %v1358
    %v1431 = vpop.f32.mrb[0].mxu0
    %v1432 = vadd.f32 0.0, %v1431
    %v1433 = vpop.f32.mrb[0].mxu0
    %1434 = vdwg.mxu0
    %v1435 = vshra.s32 %v34, 4
    %v1436 = vand.u32 %v364, 7
    %v1437 = vand.u32 %v365, 7
    %vm1438 = vcmp.eq.s32.totalorder %v1435, %v1436
    %vm1439 = vcmp.eq.s32.totalorder %v1435, %v1437
    %v1440 = vsel %vm1438, %v1427, 0.0
    %v1441 = vsel %vm1439, %v1432, 0.0
    %v1442 = vadd.s32 %v364, 64
    %v1443 = vadd.s32 %v364, 72
    %v1444 = vadd.s32 %v364, 80
    %v1445 = vadd.s32 %v364, 88
    %v1446 = vadd.s32 %v364, 96
    %v1447 = vadd.s32 %v364, 104
    %v1448 = vadd.s32 %v364, 112
    %v1449 = vadd.s32 %v364, 120
    %v1450 = vand.u32 %v364, 15
    %v1451 = vand.u32 %v365, 15
    %v1452 = vand.u32 %v366, 15
    %v1453 = vand.u32 %v367, 15
    %v1454 = vand.u32 %v368, 15
    %v1455 = vand.u32 %v369, 15
    %v1456 = vand.u32 %v370, 15
    %v1457 = vand.u32 %v371, 15
    %v1458 = vand.u32 %v1442, 15
    %v1459 = vand.u32 %v1443, 15
    %v1460 = vand.u32 %v1444, 15
    %v1461 = vand.u32 %v1445, 15
    %v1462 = vand.u32 %v1446, 15
    %v1463 = vand.u32 %v1447, 15
    %v1464 = vand.u32 %v1448, 15
    %v1465 = vand.u32 %v1449, 15
    %vm1466 = vcmp.eq.s32.totalorder %v1450, %v34
    %vm1467 = vcmp.eq.s32.totalorder %v1451, %v34
    %vm1468 = vcmp.eq.s32.totalorder %v1452, %v34
    %vm1469 = vcmp.eq.s32.totalorder %v1453, %v34
    %vm1470 = vcmp.eq.s32.totalorder %v1454, %v34
    %vm1471 = vcmp.eq.s32.totalorder %v1455, %v34
    %vm1472 = vcmp.eq.s32.totalorder %v1456, %v34
    %vm1473 = vcmp.eq.s32.totalorder %v1457, %v34
    %vm1474 = vcmp.eq.s32.totalorder %v1458, %v34
    %vm1475 = vcmp.eq.s32.totalorder %v1459, %v34
    %vm1476 = vcmp.eq.s32.totalorder %v1460, %v34
    %vm1477 = vcmp.eq.s32.totalorder %v1461, %v34
    %vm1478 = vcmp.eq.s32.totalorder %v1462, %v34
    %vm1479 = vcmp.eq.s32.totalorder %v1463, %v34
    %vm1480 = vcmp.eq.s32.totalorder %v1464, %v34
    %vm1481 = vcmp.eq.s32.totalorder %v1465, %v34
    %v1482 = vsel %vm1466, 1, 0
    %v1483 = vsel %vm1467, 1, 0
    %v1484 = vsel %vm1468, 1, 0
    %v1485 = vsel %vm1469, 1, 0
    %v1486 = vsel %vm1470, 1, 0
    %v1487 = vsel %vm1471, 1, 0
    %v1488 = vsel %vm1472, 1, 0
    %v1489 = vsel %vm1473, 1, 0
    %v1490 = vsel %vm1474, 1, 0
    %v1491 = vsel %vm1475, 1, 0
    %v1492 = vsel %vm1476, 1, 0
    %v1493 = vsel %vm1477, 1, 0
    %v1494 = vsel %vm1478, 1, 0
    %v1495 = vsel %vm1479, 1, 0
    %v1496 = vsel %vm1480, 1, 0
    %v1497 = vsel %vm1481, 1, 0
    %v1498 = vcvt.s32.f32 %v1482
    %v1499 = vcvt.s32.f32 %v1483
    %v1500 = vcvt.s32.f32 %v1484
    %v1501 = vcvt.s32.f32 %v1485
    %v1502 = vcvt.s32.f32 %v1486
    %v1503 = vcvt.s32.f32 %v1487
    %v1504 = vcvt.s32.f32 %v1488
    %v1505 = vcvt.s32.f32 %v1489
    %v1506 = vcvt.s32.f32 %v1490
    %v1507 = vcvt.s32.f32 %v1491
    %v1508 = vcvt.s32.f32 %v1492
    %v1509 = vcvt.s32.f32 %v1493
    %v1510 = vcvt.s32.f32 %v1494
    %v1511 = vcvt.s32.f32 %v1495
    %v1512 = vcvt.s32.f32 %v1496
    %v1513 = vcvt.s32.f32 %v1497
    %1514 = vmatprep.subr.mxu0 0.0
    %1515 = vmatpush1.msra.mxu0 %v1498
    %1516 = vmatprep.subr.mxu0 0.0
    %1517 = vmatpush1.msra.mxu0 %v1499
    %1518 = vmatprep.subr.mxu0 0.0
    %1519 = vmatpush1.msra.mxu0 %v1500
    %1520 = vmatprep.subr.mxu0 0.0
    %1521 = vmatpush1.msra.mxu0 %v1501
    %1522 = vmatprep.subr.mxu0 0.0
    %1523 = vmatpush1.msra.mxu0 %v1502
    %1524 = vmatprep.subr.mxu0 0.0
    %1525 = vmatpush1.msra.mxu0 %v1503
    %1526 = vmatprep.subr.mxu0 0.0
    %1527 = vmatpush1.msra.mxu0 %v1504
    %1528 = vmatprep.subr.mxu0 0.0
    %1529 = vmatpush1.msra.mxu0 %v1505
    %1530 = vmatprep.subr.mxu0 0.0
    %1531 = vmatpush1.msra.mxu0 %v1506
    %1532 = vmatprep.subr.mxu0 0.0
    %1533 = vmatpush1.msra.mxu0 %v1507
    %1534 = vmatprep.subr.mxu0 0.0
    %1535 = vmatpush1.msra.mxu0 %v1508
    %1536 = vmatprep.subr.mxu0 0.0
    %1537 = vmatpush1.msra.mxu0 %v1509
    %1538 = vmatprep.subr.mxu0 0.0
    %1539 = vmatpush1.msra.mxu0 %v1510
    %1540 = vmatprep.subr.mxu0 0.0
    %1541 = vmatpush1.msra.mxu0 %v1511
    %1542 = vmatprep.subr.mxu0 0.0
    %1543 = vmatpush1.msra.mxu0 %v1512
    %1544 = vmatprep.subr.mxu0 0.0
    %1545 = vmatpush1.msra.mxu0 %v1513
    %1546 = vmatprep.subr.mxu0 0.0
    %1547 = vmatpush1.msra.mxu0 0.0
    %1548 = vmatprep.subr.mxu0 0.0
    %1549 = vmatpush1.msra.mxu0 0.0
    %1550 = vmatprep.subr.mxu0 0.0
    %1551 = vmatpush1.msra.mxu0 0.0
    %1552 = vmatprep.subr.mxu0 0.0
    %1553 = vmatpush1.msra.mxu0 0.0
    %1554 = vmatprep.subr.mxu0 0.0
    %1555 = vmatpush1.msra.mxu0 0.0
    %1556 = vmatprep.subr.mxu0 0.0
    %1557 = vmatpush1.msra.mxu0 0.0
    %1558 = vmatprep.subr.mxu0 0.0
    %1559 = vmatpush1.msra.mxu0 0.0
    %1560 = vmatprep.subr.mxu0 0.0
    %1561 = vmatpush1.msra.mxu0 0.0
    %1562 = vmatprep.subr.mxu0 0.0
    %1563 = vmatpush1.msra.mxu0 0.0
    %1564 = vmatprep.subr.mxu0 0.0
    %1565 = vmatpush1.msra.mxu0 0.0
    %1566 = vmatprep.subr.mxu0 0.0
    %1567 = vmatpush1.msra.mxu0 0.0
    %1568 = vmatprep.subr.mxu0 0.0
    %1569 = vmatpush1.msra.mxu0 0.0
    %1570 = vmatprep.subr.mxu0 0.0
    %1571 = vmatpush1.msra.mxu0 0.0
    %1572 = vmatprep.subr.mxu0 0.0
    %1573 = vmatpush1.msra.mxu0 0.0
    %1574 = vmatprep.subr.mxu0 0.0
    %1575 = vmatpush1.msra.mxu0 0.0
    %1576 = vmatprep.subr.mxu0 0.0
    %1577 = vmatpush1.msra.mxu0 0.0
    %1578 = vmatprep.mubr.f32.mxu0 0.0
    %1579 = vmatmul.mubr.f32.gmra.mrb[0].mxu0 %v1440
    %v1580 = vpop.f32.mrb[0].mxu0
    %v1581 = vadd.f32 0.0, %v1580
    %v1582 = vpop.f32.mrb[0].mxu0
    %1583 = vmatprep.mubr.f32.mxu0 0.0
    %1584 = vmatmul.mubr.f32.gmra.mrb[0].mxu0 %v1441
    %v1585 = vpop.f32.mrb[0].mxu0
    %v1586 = vadd.f32 0.0, %v1585
    %v1587 = vpop.f32.mrb[0].mxu0
    %1588 = vdwg.mxu0
    %vm1589 = vcmp.eq.s32.totalorder %v372, %v364
    %v1590 = vsel %vm1589, 1, 0
    %v1591 = vcvt.s32.f32 %v1590
    %v1592 = vld [vmem:[%s8 + $0x7] sm:$0x1]
    %v1593 = vlaneseq
    %v1594 = vshrl.u32 %v1593, 7
    %v1595 = vsub.s32 0, %v1594
    %v1596 = vrot.slane %v1592, %v1595
    %v1598 = vsel %vm574, %v1591, 0
    %1600 = vmatprep.subr.mxu0 0.0
    %1601 = vmatpush1.msra.mxu0 %v1581
    %1602 = vmatprep.subr.mxu0 0.0
    %1603 = vmatpush1.msra.mxu0 %v1586
    %1604 = vmatprep.subr.mxu0 0.0
    %1605 = vmatpush1.msra.mxu0 0.0
    %1606 = vmatprep.subr.mxu0 0.0
    %1607 = vmatpush1.msra.mxu0 0.0
    %1608 = vmatprep.subr.mxu0 0.0
    %1609 = vmatpush1.msra.mxu0 0.0
    %1610 = vmatprep.subr.mxu0 0.0
    %1611 = vmatpush1.msra.mxu0 0.0
    %1612 = vmatprep.subr.mxu0 0.0
    %1613 = vmatpush1.msra.mxu0 0.0
    %1614 = vmatprep.subr.mxu0 0.0
    %1615 = vmatpush1.msra.mxu0 0.0
    %1616 = vmatprep.subr.mxu0 0.0
    %1617 = vmatpush1.msra.mxu0 0.0
    %1618 = vmatprep.subr.mxu0 0.0
    %1619 = vmatpush1.msra.mxu0 0.0
    %1620 = vmatprep.subr.mxu0 0.0
    %1621 = vmatpush1.msra.mxu0 0.0
    %1622 = vmatprep.subr.mxu0 0.0
    %1623 = vmatpush1.msra.mxu0 0.0
    %1624 = vmatprep.subr.mxu0 0.0
    %1625 = vmatpush1.msra.mxu0 0.0
    %1626 = vmatprep.subr.mxu0 0.0
    %1627 = vmatpush1.msra.mxu0 0.0
    %1628 = vmatprep.subr.mxu0 0.0
    %1629 = vmatpush1.msra.mxu0 0.0
    %1630 = vmatprep.subr.mxu0 0.0
    %1631 = vmatpush1.msra.mxu0 0.0
    %1632 = vmatprep.subr.mxu0 0.0
    %1633 = vmatpush1.msra.mxu0 0.0
    %1634 = vmatprep.subr.mxu0 0.0
    %1635 = vmatpush1.msra.mxu0 0.0
    %1636 = vmatprep.subr.mxu0 0.0
    %1637 = vmatpush1.msra.mxu0 0.0
    %1638 = vmatprep.subr.mxu0 0.0
    %1639 = vmatpush1.msra.mxu0 0.0
    %1640 = vmatprep.subr.mxu0 0.0
    %1641 = vmatpush1.msra.mxu0 0.0
    %1642 = vmatprep.subr.mxu0 0.0
    %1643 = vmatpush1.msra.mxu0 0.0
    %1644 = vmatprep.subr.mxu0 0.0
    %1645 = vmatpush1.msra.mxu0 0.0
    %1646 = vmatprep.subr.mxu0 0.0
    %1647 = vmatpush1.msra.mxu0 0.0
    %1648 = vmatprep.subr.mxu0 0.0
    %1649 = vmatpush1.msra.mxu0 0.0
    %1650 = vmatprep.subr.mxu0 0.0
    %1651 = vmatpush1.msra.mxu0 0.0
    %1652 = vmatprep.subr.mxu0 0.0
    %1653 = vmatpush1.msra.mxu0 0.0
    %1654 = vmatprep.subr.mxu0 0.0
    %1655 = vmatpush1.msra.mxu0 0.0
    %1656 = vmatprep.subr.mxu0 0.0
    %1657 = vmatpush1.msra.mxu0 0.0
    %1658 = vmatprep.subr.mxu0 0.0
    %1659 = vmatpush1.msra.mxu0 0.0
    %1660 = vmatprep.subr.mxu0 0.0
    %1661 = vmatpush1.msra.mxu0 0.0
    %1662 = vmatprep.subr.mxu0 0.0
    %1663 = vmatpush1.msra.mxu0 0.0
    %1664 = vmatprep.mubr.f32.mxu0 0.0
    %1665 = vmatmul.mubr.f32.gmra.mrb[0].mxu0 %v1598
    %v1666 = vpop.f32.mrb[0].mxu0
    %v1667 = vadd.f32 %v1596, %v1666
    %v1668 = vpop.f32.mrb[0].mxu0
    %1669 = vdwg.mxu0
    %vm1670 = vcmask 123904
    %1671 = vst.msk [vmem:[#allocation2] sm:$0x3] %vm1670, %v1667
    // Predicated region
    $region38: #{transformer_forward.1} parent=1 // pred_check
      _
    $region39: #{transformer_forward.1} parent=1 // pred_check_branch
      %1673 = sbr.rel (0) target = $region41
    $region40: #{transformer_forward.1} parent=1 // pred_region
      %s1675 = ssub.s32 32, 32
      %1676 = vsyncadd [#allocation3], %s1675
      %s1678 = sshll.u32 [#allocation2], 4
      %s1679 = int_to_ptr.vmem [resolvable:$true] %s1678
      %1681 = dma.vmem_to_hbm [thread:$0]  %s1679, 32, %s9, [#allocation3]
    $region41: #{transformer_forward.1} parent=1 // pred_fallthru
      _
    // Predicated region
    $region42: #{transformer_forward.1} parent=1 // pred_check
      _
    $region43: #{transformer_forward.1} parent=1 // pred_check_branch
      %1683 = sbr.rel (0) target = $region45
    $region44: #{transformer_forward.1} parent=1 // pred_region
      %1684 = dma.done [#allocation3], 32
    $region45: #{transformer_forward.1} parent=1 // pred_fallthru
      _
    %1685 = vsyncpa [#allocation3], 1

</llo_original>
